<compile_context>
chip_gen: v7x
topology: tpu7x:2x2x1
jax: 0.10.0
libtpu: 0.0.40
codegen_flags: <defaults>
</compile_context>

<pallas_src>
import functools

import jax
import jax.numpy as jnp
from jax import lax
from jax.experimental import pallas as pl
from jax.experimental.pallas import tpu as pltpu


def _contra_loss_kernel(*refs, has_pmask, has_pad):
    # ids path : rid[tq,1], cid[1,tk], cnt[tq,1], (cb[1,tk]), f_row, f_col, out, 3x scratch
    # mask path: pm[tq,tk],            cnt[tq,1], (cb[1,tk]), f_row, f_col, out, 3x scratch
    refs = list(refs)
    if has_pmask:
        pm_ref = refs.pop(0)
    else:
        rid_ref = refs.pop(0)
        cid_ref = refs.pop(0)
    cnt_ref = refs.pop(0)
    cb_ref = refs.pop(0) if has_pad else None
    f_row_ref, f_col_ref, out_ref, m_sc, l_sc, ns_sc = refs

    i = pl.program_id(0)
    k = pl.program_id(1)
    tq = f_row_ref.shape[0]
    tk = f_col_ref.shape[0]

    @pl.when(k == 0)
    def _init():
        m_sc[...] = jnp.full_like(m_sc, -jnp.inf)
        l_sc[...] = jnp.zeros_like(l_sc)
        ns_sc[...] = jnp.zeros_like(ns_sc)

    # scores = (f_i . f_j) / T ; sqrt(1/T) is already folded into both operands.
    # Contract the feature dim of BOTH operands (A @ B^T form, no in-kernel
    # transpose), f32 MXU accumulation.
    s = lax.dot_general(
        f_row_ref[...], f_col_ref[...],
        dimension_numbers=(((1,), (1,)), ((), ())),
        preferred_element_type=jnp.float32)

    # Column-padding exclusion as a [1, tk] additive bias (only emitted when N
    # was padded); keeps padded columns out of the row max and the denominator.
    if has_pad:
        s_b = s + cb_ref[...]
    else:
        s_b = s

    # Online row max (diagonal included, as in the reference) + running,
    # rescaled denominator.
    m_prev = m_sc[...]
    m_new = jnp.maximum(m_prev, jnp.max(s_b, axis=1, keepdims=True))
    alpha = jnp.exp(m_prev - m_new)
    m_sc[...] = m_new
    l_base = alpha * l_sc[...]
    e = jnp.exp(s_b - m_new)

    # Positive mask (numerator only). Padded columns need no special handling:
    # their scores are exactly 0 (zero-padded features) and cnt is precomputed
    # in the wrapper over real columns only.
    if has_pmask:
        pos = pm_ref[...] != 0              # diagonal pre-zeroed in the wrapper
    else:
        pos = rid_ref[...] == cid_ref[...]

    # Diagonal exclusion only on tiles that intersect the diagonal:
    # global diag hits local (r, c) with c - r == delta.
    delta = i * tq - k * tk
    crosses = (delta > -tq) & (delta < tk)

    @pl.when(crosses)
    def _diag_tile():
        ri = lax.broadcasted_iota(jnp.int32, (tq, tk), 0)
        ci = lax.broadcasted_iota(jnp.int32, (tq, tk), 1)
        offd = (ci - ri) != delta
        l_sc[...] = l_base + jnp.sum(jnp.where(offd, e, 0.0),
                                     axis=1, keepdims=True)
        num_pos = pos if has_pmask else (pos & offd)
        ns_sc[...] = ns_sc[...] + jnp.sum(jnp.where(num_pos, s, 0.0),
                                          axis=1, keepdims=True)

    @pl.when(jnp.logical_not(crosses))
    def _plain_tile():
        l_sc[...] = l_base + jnp.sum(e, axis=1, keepdims=True)
        ns_sc[...] = ns_sc[...] + jnp.sum(jnp.where(pos, s, 0.0),
                                          axis=1, keepdims=True)

    @pl.when(k == pl.num_programs(1) - 1)
    def _finalize():
        cnt = cnt_ref[...]
        log_denom = m_sc[...] + jnp.log(l_sc[...] + 1e-10)
        # sum_j mask*(s - log_denom) = sum_j mask*s - cnt*log_denom
        out_ref[...] = (ns_sc[...] - cnt * log_denom) / (cnt + 1e-10)


def _round_up(x, m):
    return ((x + m - 1) // m) * m


def _vmem_budget():
    # Tile-sizing budget + requested scoped-VMEM limit, derived from the chip's
    # VMEM capacity (v5e/v6e: 128 MiB, v7x: 64 MiB), with compiler headroom.
    try:
        cap = int(pltpu.get_tpu_info().vmem_capacity_bytes)
    except Exception:
        cap = 64 << 20                      # conservative default (v7x physical)
    return int(cap * 0.55), int(cap * 0.75)


def _choose_tiles(n, d_pad, feat_bytes, has_pmask):
    budget, vmem_limit = _vmem_budget()
    tq = 128 if n <= 4096 else 256          # small tq: bounded [tq,tk] temps and
                                            # >= 2 row tiles for v7x's 2 TCs
    n128 = _round_up(n, tq)
    cap = min(n128, 4096)

    def usage(tk):                          # rough double-buffered VMEM model
        u = 2 * tq * d_pad * feat_bytes             # f_row blocks
        u += 2 * tk * d_pad * feat_bytes            # f_col blocks
        if has_pmask:
            u += 2 * tq * tk                        # int8 mask blocks
        u += 5 * tq * tk * 4                        # [tq, tk] f32 intermediates
        u += 4 * (tq + tk) * 4 + 8 * tq * 4         # ids/bias/cnt/out/scratch
        return u

    tk = cap
    while tk > tq and usage(tk) > budget:
        tk -= tq
    # Re-split so n_pad % tk == 0 with minimal padding (same number of k steps).
    k_steps = -(-n128 // tk)
    tk = _round_up(-(-n128 // k_steps), tq)
    n_pad = k_steps * tk
    return tq, tk, n_pad, vmem_limit


def contra_loss(features, labels=None, mask=None, *, temperature=0.2,
                compute_dtype=jnp.bfloat16):
    """JAX/Pallas equivalent of ContraLoss.forward (forward pass only).

    features: [bsz, n_views, ...]; labels: optional [bsz] integer ids;
    mask: optional [bsz, bsz] binary contrast mask.  compute_dtype is the MXU
    operand dtype (bf16 by default; accumulation is always f32).
    """
    if features.ndim < 3:
        raise ValueError('`features` needs to be [bsz, n_views, ...]')
    if features.ndim > 3:
        features = features.reshape(features.shape[0], features.shape[1], -1)
    bsz, n_views, d = features.shape
    if labels is not None and mask is not None:
        raise ValueError('Cannot define both `labels` and `mask`')

    n = n_views * bsz
    # view-major stacking == torch.cat(torch.unbind(features, dim=1), dim=0)
    cf = jnp.transpose(features, (1, 0, 2)).reshape(n, d).astype(jnp.float32)
    # Fold 1/temperature into both operands: (a f_i).(a f_j) = (f_i.f_j)/T.
    cf = cf * (float(1.0 / temperature) ** 0.5)
    if compute_dtype is not None:
        cf = cf.astype(compute_dtype)

    feat_bytes = jnp.dtype(cf.dtype).itemsize
    d_pad = _round_up(d, 128)
    has_pmask = mask is not None
    tq, tk, n_pad, vmem_limit = _choose_tiles(n, d_pad, feat_bytes, has_pmask)
    cf = jnp.pad(cf, ((0, n_pad - n), (0, d_pad - d)))
    has_pad = n_pad > n

    grid = (n_pad // tq, n_pad // tk)
    f_row_spec = pl.BlockSpec((tq, d_pad), lambda i, k: (i, 0))
    f_col_spec = pl.BlockSpec((tk, d_pad), lambda i, k: (k, 0))
    cnt_spec = pl.BlockSpec((tq, 1), lambda i, k: (i, 0))
    out_spec = pl.BlockSpec((tq, 1), lambda i, k: (i, 0))
    scratch = [pltpu.VMEM((tq, 1), jnp.float32) for _ in range(3)]

    # Positives-per-row (diagonal excluded), precomputed outside the kernel.
    if has_pmask:
        # TODO(synk): the explicit `mask` is treated as binary (as documented);
        # fractional mask weights are not supported by this streamed path.
        base = jnp.asarray(mask)
        if base.shape != (bsz, bsz):
            raise ValueError('`mask` must be [bsz, bsz]')
        full = jnp.tile(base != 0, (n_views, n_views))
        full = full & ~jnp.eye(n, dtype=bool)            # pre-apply logits_mask
        cnt = jnp.sum(full, axis=1).astype(jnp.float32)
        full_i8 = jnp.pad(full.astype(jnp.int8),
                          ((0, n_pad - n), (0, n_pad - n)))
    else:
        if labels is None:
            gid = jnp.arange(bsz, dtype=jnp.int32)       # SimCLR / eye mask
        else:
            labels = jnp.asarray(labels).reshape(-1)
            if labels.shape[0] != bsz:
                raise ValueError('Num of labels does not match num of features')
            if not jnp.issubdtype(labels.dtype, jnp.integer):
                raise ValueError('`labels` must be integer ids')
            gid = labels.astype(jnp.int32)
        per_sample = jnp.sum(gid[:, None] == gid[None, :], axis=1)
        cnt = jnp.tile(n_views * per_sample - 1, n_views).astype(jnp.float32)
        ids = jnp.pad(jnp.tile(gid, n_views), (0, n_pad - n),
                      constant_values=-1)
        ids_row = ids.reshape(n_pad, 1)
        ids_col = ids.reshape(1, n_pad)

    cnt_col = jnp.pad(cnt, (0, n_pad - n)).reshape(n_pad, 1)

    kernel = functools.partial(_contra_loss_kernel,
                               has_pmask=has_pmask, has_pad=has_pad)
    if has_pmask:
        in_specs = [pl.BlockSpec((tq, tk), lambda i, k: (i, k)), cnt_spec]
        args = [full_i8, cnt_col]
    else:
        in_specs = [pl.BlockSpec((tq, 1), lambda i, k: (i, 0)),
                    pl.BlockSpec((1, tk), lambda i, k: (0, k)),
                    cnt_spec]
        args = [ids_row, ids_col, cnt_col]
    if has_pad:
        col_bias = jnp.where(jnp.arange(n_pad) < n, 0.0, -1e30)
        col_bias = col_bias.astype(jnp.float32).reshape(1, n_pad)
        in_specs.append(pl.BlockSpec((1, tk), lambda i, k: (0, k)))
        args.append(col_bias)
    in_specs += [f_row_spec, f_col_spec]
    args += [cf, cf]

    mlpp = pl.pallas_call(
        kernel,
        out_shape=jax.ShapeDtypeStruct((n_pad, 1), jnp.float32),
        grid_spec=pltpu.PrefetchScalarGridSpec(
            num_scalar_prefetch=0,
            grid=grid,
            in_specs=in_specs,
            out_specs=out_spec,
            scratch_shapes=scratch),
        compiler_params=pltpu.CompilerParams(
            dimension_semantics=("parallel", "arbitrary"),
            vmem_limit_bytes=vmem_limit),
    )(*args)

    # loss = mean_i( -T * mean_log_prob_pos_i ) over the N real rows.
    return -temperature * jnp.mean(mlpp[:n, 0])


def _reference_contra_loss(features, labels=None, mask=None, temperature=0.2):
    # Pure-JAX reference mirroring the PyTorch module, for sanity checks.
    if features.ndim > 3:
        features = features.reshape(features.shape[0], features.shape[1], -1)
    bsz, n_views, d = features.shape
    if mask is None:
        if labels is None:
            base = jnp.eye(bsz, dtype=jnp.float32)
        else:
            labels = labels.reshape(-1, 1)
            base = (labels == labels.T).astype(jnp.float32)
    else:
        base = mask.astype(jnp.float32)
    cf = jnp.transpose(features, (1, 0, 2)).reshape(n_views * bsz, d)
    cf = cf.astype(jnp.float32)
    s = cf @ cf.T / temperature
    logits = s - jnp.max(s, axis=1, keepdims=True)
    m = jnp.tile(base, (n_views, n_views))
    nn = m.shape[0]
    lm = 1.0 - jnp.eye(nn, dtype=jnp.float32)
    m = m * lm
    el = jnp.exp(logits) * lm
    lp = logits - jnp.log(el.sum(1, keepdims=True) + 1e-10)
    mlpp = (m * lp).sum(1) / (m.sum(1) + 1e-10)
    return (-temperature * mlpp).mean()


if __name__ == "__main__":
    key = jax.random.PRNGKey(0)
    bsz, n_views, hidden = 8, 2, 32
    kf, kl = jax.random.split(key)
    features = jax.random.normal(kf, (bsz, n_views, hidden), dtype=jnp.float32)
    labels = jax.random.randint(kl, (bsz,), 0, 4)
    ext_mask = (labels[:, None] == labels[None, :]).astype(jnp.float32)

    # Exact-dtype (f32 MXU operand) checks against the reference:
    loss_simclr = contra_loss(features, temperature=0.2,
                              compute_dtype=jnp.float32)
    loss_sup = contra_loss(features, labels=labels, temperature=0.2,
                           compute_dtype=jnp.float32)
    loss_mask = contra_loss(features, mask=ext_mask, temperature=0.2,
                            compute_dtype=jnp.float32)
    jax.block_until_ready((loss_simclr, loss_sup, loss_mask))

    ref_simclr = _reference_contra_loss(features, temperature=0.2)
    ref_sup = _reference_contra_loss(features, labels=labels, temperature=0.2)
    ref_mask = _reference_contra_loss(features, mask=ext_mask, temperature=0.2)
    assert jnp.allclose(loss_simclr, ref_simclr, rtol=1e-3, atol=1e-3), (
        loss_simclr, ref_simclr)
    assert jnp.allclose(loss_sup, ref_sup, rtol=1e-3, atol=1e-3), (
        loss_sup, ref_sup)
    assert jnp.allclose(loss_mask, ref_mask, rtol=1e-3, atol=1e-3), (
        loss_mask, ref_mask)

    # Default fast path: bf16 MXU operands, f32 accumulation.
    loss_bf16 = contra_loss(features, labels=labels, temperature=0.2)
    jax.block_until_ready(loss_bf16)
    assert jnp.allclose(loss_bf16, ref_sup, rtol=5e-2, atol=5e-2), (
        loss_bf16, ref_sup)

    # TODO(synk): forward-only; no custom VJP is defined and the in-kernel
    # row-max is not detached (PyTorch detaches logits_max), so do not take
    # gradients through this pallas_call.
    print("KERNEL_OK")
</pallas_src>

<mosaic_0001>
module attributes {stable_mosaic.version = 11 : i64} {
  func.func @_contra_loss_kernel(%arg0: i32, %arg1: i32, %arg2: memref<128x1xi32, #tpu.memory_space<vmem>>, %arg3: memref<1x128xi32, #tpu.memory_space<vmem>>, %arg4: memref<128x1xf32, #tpu.memory_space<vmem>>, %arg5: memref<1x128xf32, #tpu.memory_space<vmem>>, %arg6: memref<128x128xf32, #tpu.memory_space<vmem>>, %arg7: memref<128x128xf32, #tpu.memory_space<vmem>>, %arg8: memref<128x1xf32, #tpu.memory_space<vmem>>, %arg9: memref<128x1xf32, #tpu.memory_space<vmem>>, %arg10: memref<128x1xf32, #tpu.memory_space<vmem>>, %arg11: memref<128x1xf32, #tpu.memory_space<vmem>>) attributes {dimension_semantics = [#tpu.dimension_semantics<parallel>, #tpu.dimension_semantics<arbitrary>], iteration_bounds = array<i64: 1, 1>, scalar_prefetch = 0 : i64, scratch_operands = 3 : i64, tpu.core_type = #tpu.core_type<tc>, window_params = [{transform_indices = @transform_0, window_bounds = array<i64: 128, 1>}, {transform_indices = @transform_1, window_bounds = array<i64: 1, 128>}, {transform_indices = @transform_2, window_bounds = array<i64: 128, 1>}, {transform_indices = @transform_3, window_bounds = array<i64: 1, 128>}, {transform_indices = @transform_4, window_bounds = array<i64: 128, 128>}, {transform_indices = @transform_5, window_bounds = array<i64: 128, 128>}, {transform_indices = @transform_6, window_bounds = array<i64: 128, 1>}]} {
    %c0_i32 = arith.constant 0 : i32
    %0 = arith.cmpi eq, %arg1, %c0_i32 : i32
    %1 = arith.extui %0 : i1 to i32
    %c0_i32_0 = arith.constant 0 : i32
    %2 = arith.cmpi ne, %1, %c0_i32_0 : i32
    scf.if %2 {
      %cst_23 = arith.constant 0xFF800000 : f32
      %40 = vector.broadcast %cst_23 : f32 to vector<128x1xf32>
      %c0_24 = arith.constant 0 : index
      %c0_25 = arith.constant 0 : index
      %41 = vector.load %arg9[%c0_24, %c0_25] : memref<128x1xf32, #tpu.memory_space<vmem>>, vector<128x1xf32>
      tpu.vector_store %arg9[%c0_24, %c0_25], %40 {strides = array<i32>} : memref<128x1xf32, #tpu.memory_space<vmem>>, vector<128x1xf32>,
      %cst_26 = arith.constant 0.000000e+00 : f32
      %42 = vector.broadcast %cst_26 : f32 to vector<128x1xf32>
      %c0_27 = arith.constant 0 : index
      %c0_28 = arith.constant 0 : index
      %43 = vector.load %arg10[%c0_27, %c0_28] : memref<128x1xf32, #tpu.memory_space<vmem>>, vector<128x1xf32>
      tpu.vector_store %arg10[%c0_27, %c0_28], %42 {strides = array<i32>} : memref<128x1xf32, #tpu.memory_space<vmem>>, vector<128x1xf32>,
      %cst_29 = arith.constant 0.000000e+00 : f32
      %44 = vector.broadcast %cst_29 : f32 to vector<128x1xf32>
      %c0_30 = arith.constant 0 : index
      %c0_31 = arith.constant 0 : index
      %45 = vector.load %arg11[%c0_30, %c0_31] : memref<128x1xf32, #tpu.memory_space<vmem>>, vector<128x1xf32>
      tpu.vector_store %arg11[%c0_30, %c0_31], %44 {strides = array<i32>} : memref<128x1xf32, #tpu.memory_space<vmem>>, vector<128x1xf32>,
    } else {
    }
    %c0 = arith.constant 0 : index
    %c0_1 = arith.constant 0 : index
    %3 = vector.load %arg6[%c0, %c0_1] : memref<128x128xf32, #tpu.memory_space<vmem>>, vector<128x128xf32>
    %c0_2 = arith.constant 0 : index
    %c0_3 = arith.constant 0 : index
    %4 = vector.load %arg7[%c0_2, %c0_3] : memref<128x128xf32, #tpu.memory_space<vmem>>, vector<128x128xf32>
    %cst = arith.constant dense<0.000000e+00> : vector<128x128xf32>
    %5 = tpu.matmul %3, %4, %cst {dimension_numbers = #tpu.dot_dimension_numbers<[1], [1], [0], [0], [0, 0, 1, 0], [], []>} : vector<128x128xf32>, vector<128x128xf32>, vector<128x128xf32> -> vector<128x128xf32>
    %c0_4 = arith.constant 0 : index
    %c0_5 = arith.constant 0 : index
    %6 = vector.load %arg5[%c0_4, %c0_5] : memref<1x128xf32, #tpu.memory_space<vmem>>, vector<1x128xf32>
    %7 = vector.broadcast %6 : vector<1x128xf32> to vector<128x128xf32>
    %8 = arith.addf %5, %7 : vector<128x128xf32>
    %c0_6 = arith.constant 0 : index
    %c0_7 = arith.constant 0 : index
    %9 = vector.load %arg9[%c0_6, %c0_7] : memref<128x1xf32, #tpu.memory_space<vmem>>, vector<128x1xf32>
    %cst_8 = arith.constant dense<0xFF800000> : vector<128xf32>
    %10 = vector.multi_reduction <maximumf>, %8, %cst_8 [1] : vector<128x128xf32> to vector<128xf32>
    %11 = vector.shape_cast %10 : vector<128xf32> to vector<128x1xf32>
    %12 = arith.maximumf %9, %11 : vector<128x1xf32>
    %13 = arith.subf %9, %12 : vector<128x1xf32>
    %14 = math.exp %13 : vector<128x1xf32>
    %c0_9 = arith.constant 0 : index
    %c0_10 = arith.constant 0 : index
    %15 = vector.load %arg9[%c0_9, %c0_10] : memref<128x1xf32, #tpu.memory_space<vmem>>, vector<128x1xf32>
    tpu.vector_store %arg9[%c0_9, %c0_10], %12 {strides = array<i32>} : memref<128x1xf32, #tpu.memory_space<vmem>>, vector<128x1xf32>,
    %c0_11 = arith.constant 0 : index
    %c0_12 = arith.constant 0 : index
    %16 = vector.load %arg10[%c0_11, %c0_12] : memref<128x1xf32, #tpu.memory_space<vmem>>, vector<128x1xf32>
    %17 = arith.mulf %14, %16 : vector<128x1xf32>
    %18 = vector.broadcast %12 : vector<128x1xf32> to vector<128x128xf32>
    %19 = arith.subf %8, %18 : vector<128x128xf32>
    %20 = math.exp %19 : vector<128x128xf32>
    %c0_13 = arith.constant 0 : index
    %c0_14 = arith.constant 0 : index
    %21 = vector.load %arg2[%c0_13, %c0_14] : memref<128x1xi32, #tpu.memory_space<vmem>>, vector<128x1xi32>
    %c0_15 = arith.constant 0 : index
    %c0_16 = arith.constant 0 : index
    %22 = vector.load %arg3[%c0_15, %c0_16] : memref<1x128xi32, #tpu.memory_space<vmem>>, vector<1x128xi32>
    %23 = vector.broadcast %21 : vector<128x1xi32> to vector<128x128xi32>
    %24 = vector.broadcast %22 : vector<1x128xi32> to vector<128x128xi32>
    %25 = arith.cmpi eq, %23, %24 : vector<128x128xi32>
    %c128_i32 = arith.constant 128 : i32
    %26 = arith.muli %arg0, %c128_i32 : i32
    %c128_i32_17 = arith.constant 128 : i32
    %27 = arith.muli %arg1, %c128_i32_17 : i32
    %28 = arith.subi %26, %27 : i32
    %c-128_i32 = arith.constant -128 : i32
    %29 = arith.cmpi sgt, %28, %c-128_i32 : i32
    %c128_i32_18 = arith.constant 128 : i32
    %30 = arith.cmpi slt, %28, %c128_i32_18 : i32
    %31 = arith.andi %29, %30 : i1
    %32 = arith.extui %31 : i1 to i32
    %c0_i32_19 = arith.constant 0 : i32
    %33 = arith.cmpi ne, %32, %c0_i32_19 : i32
    scf.if %33 {
      %40 = tpu.iota {dimensions = array<i32: 0>} : vector<128x128xi32>
      %41 = tpu.iota {dimensions = array<i32: 1>} : vector<128x128xi32>
      %42 = arith.subi %41, %40 : vector<128x128xi32>
      %43 = vector.broadcast %28 : i32 to vector<128x128xi32>
      %44 = arith.cmpi ne, %42, %43 : vector<128x128xi32>
      %cst_23 = arith.constant 0.000000e+00 : f32
      %45 = vector.broadcast %cst_23 : f32 to vector<128x128xf32>
      %46 = arith.select %44, %20, %45 : vector<128x128xi1>, vector<128x128xf32>
      %cst_24 = arith.constant dense<0.000000e+00> : vector<128xf32>
      %47 = vector.multi_reduction <add>, %46, %cst_24 [1] : vector<128x128xf32> to vector<128xf32>
      %48 = vector.shape_cast %47 : vector<128xf32> to vector<128x1xf32>
      %49 = arith.addf %17, %48 : vector<128x1xf32>
      %c0_25 = arith.constant 0 : index
      %c0_26 = arith.constant 0 : index
      %50 = vector.load %arg10[%c0_25, %c0_26] : memref<128x1xf32, #tpu.memory_space<vmem>>, vector<128x1xf32>
      tpu.vector_store %arg10[%c0_25, %c0_26], %49 {strides = array<i32>} : memref<128x1xf32, #tpu.memory_space<vmem>>, vector<128x1xf32>,
      %51 = arith.andi %25, %44 : vector<128x128xi1>
      %c0_27 = arith.constant 0 : index
      %c0_28 = arith.constant 0 : index
      %52 = vector.load %arg11[%c0_27, %c0_28] : memref<128x1xf32, #tpu.memory_space<vmem>>, vector<128x1xf32>
      %cst_29 = arith.constant 0.000000e+00 : f32
      %53 = vector.broadcast %cst_29 : f32 to vector<128x128xf32>
      %54 = arith.select %51, %5, %53 : vector<128x128xi1>, vector<128x128xf32>
      %cst_30 = arith.constant dense<0.000000e+00> : vector<128xf32>
      %55 = vector.multi_reduction <add>, %54, %cst_30 [1] : vector<128x128xf32> to vector<128xf32>
      %56 = vector.shape_cast %55 : vector<128xf32> to vector<128x1xf32>
      %57 = arith.addf %52, %56 : vector<128x1xf32>
      %c0_31 = arith.constant 0 : index
      %c0_32 = arith.constant 0 : index
      %58 = vector.load %arg11[%c0_31, %c0_32] : memref<128x1xf32, #tpu.memory_space<vmem>>, vector<128x1xf32>
      tpu.vector_store %arg11[%c0_31, %c0_32], %57 {strides = array<i32>} : memref<128x1xf32, #tpu.memory_space<vmem>>, vector<128x1xf32>,
    } else {
    }
    %true = arith.constant true
    %34 = arith.xori %31, %true : i1
    %35 = arith.extui %34 : i1 to i32
    %c0_i32_20 = arith.constant 0 : i32
    %36 = arith.cmpi ne, %35, %c0_i32_20 : i32
    scf.if %36 {
      %cst_23 = arith.constant dense<0.000000e+00> : vector<128xf32>
      %40 = vector.multi_reduction <add>, %20, %cst_23 [1] : vector<128x128xf32> to vector<128xf32>
      %41 = vector.shape_cast %40 : vector<128xf32> to vector<128x1xf32>
      %42 = arith.addf %17, %41 : vector<128x1xf32>
      %c0_24 = arith.constant 0 : index
      %c0_25 = arith.constant 0 : index
      %43 = vector.load %arg10[%c0_24, %c0_25] : memref<128x1xf32, #tpu.memory_space<vmem>>, vector<128x1xf32>
      tpu.vector_store %arg10[%c0_24, %c0_25], %42 {strides = array<i32>} : memref<128x1xf32, #tpu.memory_space<vmem>>, vector<128x1xf32>,
      %c0_26 = arith.constant 0 : index
      %c0_27 = arith.constant 0 : index
      %44 = vector.load %arg11[%c0_26, %c0_27] : memref<128x1xf32, #tpu.memory_space<vmem>>, vector<128x1xf32>
      %cst_28 = arith.constant 0.000000e+00 : f32
      %45 = vector.broadcast %cst_28 : f32 to vector<128x128xf32>
      %46 = arith.select %25, %5, %45 : vector<128x128xi1>, vector<128x128xf32>
      %cst_29 = arith.constant dense<0.000000e+00> : vector<128xf32>
      %47 = vector.multi_reduction <add>, %46, %cst_29 [1] : vector<128x128xf32> to vector<128xf32>
      %48 = vector.shape_cast %47 : vector<128xf32> to vector<128x1xf32>
      %49 = arith.addf %44, %48 : vector<128x1xf32>
      %c0_30 = arith.constant 0 : index
      %c0_31 = arith.constant 0 : index
      %50 = vector.load %arg11[%c0_30, %c0_31] : memref<128x1xf32, #tpu.memory_space<vmem>>, vector<128x1xf32>
      tpu.vector_store %arg11[%c0_30, %c0_31], %49 {strides = array<i32>} : memref<128x1xf32, #tpu.memory_space<vmem>>, vector<128x1xf32>,
    } else {
    }
    %c0_i32_21 = arith.constant 0 : i32
    %37 = arith.cmpi eq, %arg1, %c0_i32_21 : i32
    %38 = arith.extui %37 : i1 to i32
    %c0_i32_22 = arith.constant 0 : i32
    %39 = arith.cmpi ne, %38, %c0_i32_22 : i32
    scf.if %39 {
      %c0_23 = arith.constant 0 : index
      %c0_24 = arith.constant 0 : index
      %40 = vector.load %arg4[%c0_23, %c0_24] : memref<128x1xf32, #tpu.memory_space<vmem>>, vector<128x1xf32>
      %c0_25 = arith.constant 0 : index
      %c0_26 = arith.constant 0 : index
      %41 = vector.load %arg9[%c0_25, %c0_26] : memref<128x1xf32, #tpu.memory_space<vmem>>, vector<128x1xf32>
      %c0_27 = arith.constant 0 : index
      %c0_28 = arith.constant 0 : index
      %42 = vector.load %arg10[%c0_27, %c0_28] : memref<128x1xf32, #tpu.memory_space<vmem>>, vector<128x1xf32>
      %cst_29 = arith.constant 1.000000e-10 : f32
      %43 = vector.broadcast %cst_29 : f32 to vector<128x1xf32>
      %44 = arith.addf %42, %43 : vector<128x1xf32>
      %45 = math.log %44 : vector<128x1xf32>
      %46 = arith.addf %41, %45 : vector<128x1xf32>
      %c0_30 = arith.constant 0 : index
      %c0_31 = arith.constant 0 : index
      %47 = vector.load %arg11[%c0_30, %c0_31] : memref<128x1xf32, #tpu.memory_space<vmem>>, vector<128x1xf32>
      %48 = arith.mulf %40, %46 : vector<128x1xf32>
      %49 = arith.subf %47, %48 : vector<128x1xf32>
      %cst_32 = arith.constant 1.000000e-10 : f32
      %50 = vector.broadcast %cst_32 : f32 to vector<128x1xf32>
      %51 = arith.addf %40, %50 : vector<128x1xf32>
      %52 = arith.divf %49, %51 : vector<128x1xf32>
      %c0_33 = arith.constant 0 : index
      %c0_34 = arith.constant 0 : index
      %53 = vector.load %arg8[%c0_33, %c0_34] : memref<128x1xf32, #tpu.memory_space<vmem>>, vector<128x1xf32>
      tpu.vector_store %arg8[%c0_33, %c0_34], %52 {strides = array<i32>} : memref<128x1xf32, #tpu.memory_space<vmem>>, vector<128x1xf32>,
    } else {
    }
    return
  }
  func.func @transform_0(%arg0: i32, %arg1: i32) -> (i32, i32) {
    %c0_i32 = arith.constant 0 : i32
    %c0_i32_0 = arith.constant 0 : i32
    return %arg0, %c0_i32 : i32, i32
  }
  func.func @transform_1(%arg0: i32, %arg1: i32) -> (i32, i32) {
    %c0_i32 = arith.constant 0 : i32
    %c0_i32_0 = arith.constant 0 : i32
    return %c0_i32, %arg1 : i32, i32
  }
  func.func @transform_2(%arg0: i32, %arg1: i32) -> (i32, i32) {
    %c0_i32 = arith.constant 0 : i32
    %c0_i32_0 = arith.constant 0 : i32
    return %arg0, %c0_i32 : i32, i32
  }
  func.func @transform_3(%arg0: i32, %arg1: i32) -> (i32, i32) {
    %c0_i32 = arith.constant 0 : i32
    %c0_i32_0 = arith.constant 0 : i32
    return %c0_i32, %arg1 : i32, i32
  }
  func.func @transform_4(%arg0: i32, %arg1: i32) -> (i32, i32) {
    %c0_i32 = arith.constant 0 : i32
    %c0_i32_0 = arith.constant 0 : i32
    return %arg0, %c0_i32 : i32, i32
  }
  func.func @transform_5(%arg0: i32, %arg1: i32) -> (i32, i32) {
    %c0_i32 = arith.constant 0 : i32
    %c0_i32_0 = arith.constant 0 : i32
    return %arg1, %c0_i32 : i32, i32
  }
  func.func @transform_6(%arg0: i32, %arg1: i32) -> (i32, i32) {
    %c0_i32 = arith.constant 0 : i32
    %c0_i32_0 = arith.constant 0 : i32
    return %arg0, %c0_i32 : i32, i32
  }
}

</mosaic_0001>

<llo_original>
// kernel: tpu_custom_call.1
$region0: #{tpu_custom_call.1}
  #allocation0 [shape = 'u32[]', space=smem, size = 0x4, offset = 0x4, fixed_abs, tag = 'smem constant byte address 0x4 - core index']
  #allocation1 [shape = 'u32[144,128]{1,0:T(1,128)}', space=vmem, size = 0x12000, scoped, tag = 'internal scratch']
  #allocation2 [shape = 'f32[128,1]{1,0:T(8,128)}', space=vmem, size = 0x10000, scoped, tag = 'scratch operand']
  #allocation3 [shape = 'f32[128,1]{1,0:T(8,128)}', space=vmem, size = 0x10000, scoped, tag = 'scratch operand']
  #allocation4 [shape = 'f32[128,1]{1,0:T(8,128)}', space=vmem, size = 0x10000, scoped, tag = 'scratch operand']
  %s0 = inlined_call_operand.vmem [shape: s32[128,1], index: 0, kind: input, shape index: {}]
  %s1 = inlined_call_operand.vmem [shape: s32[1,128], index: 1, kind: input, shape index: {}]
  %s2 = inlined_call_operand.vmem [shape: f32[128,1], index: 2, kind: input, shape index: {}]
  %s3 = inlined_call_operand.vmem [shape: f32[1,128], index: 3, kind: input, shape index: {}]
  %s4 = inlined_call_operand.vmem [shape: f32[128,128], index: 4, kind: input, shape index: {}]
  %s5 = inlined_call_operand.vmem [shape: f32[128,128], index: 5, kind: input, shape index: {}]
  %s6 = inlined_call_operand.vmem [shape: f32[128,1], index: 6, kind: output, shape index: {}]
  %s7 = sld [smem:[#allocation0]]
  $region50: #{tpu_custom_call.1} parent=0
    _
  %s9 = ssub.s32 1, %s7
  %s10 = scalar_select 0, %s9, %s7
  // Predicated region
  $region2: #{tpu_custom_call.1} parent=0 // pred_check
    _
  $region3: #{tpu_custom_call.1} parent=0 // pred_check_branch
    %12 = sbr.rel (0) target = $region5
  $region4: #{tpu_custom_call.1} parent=0 // pred_region
    _
  $region5: #{tpu_custom_call.1} parent=0 // pred_fallthru
    _
  // Predicated region
  $region6: #{tpu_custom_call.1} parent=0 // pred_check
    _
  $region7: #{tpu_custom_call.1} parent=0 // pred_check_branch
    %14 = sbr.rel (0) target = $region9
  $region8: #{tpu_custom_call.1} parent=0 // pred_region
    _
  $region9: #{tpu_custom_call.1} parent=0 // pred_fallthru
    _
  // Predicated region
  $region10: #{tpu_custom_call.1} parent=0 // pred_check
    _
  $region11: #{tpu_custom_call.1} parent=0 // pred_check_branch
    %16 = sbr.rel (0) target = $region13
  $region12: #{tpu_custom_call.1} parent=0 // pred_region
    _
  $region13: #{tpu_custom_call.1} parent=0 // pred_fallthru
    _
  // Predicated region
  $region14: #{tpu_custom_call.1} parent=0 // pred_check
    _
  $region15: #{tpu_custom_call.1} parent=0 // pred_check_branch
    %18 = sbr.rel (0) target = $region17
  $region16: #{tpu_custom_call.1} parent=0 // pred_region
    _
  $region17: #{tpu_custom_call.1} parent=0 // pred_fallthru
    _
  // Predicated region
  $region18: #{tpu_custom_call.1} parent=0 // pred_check
    _
  $region19: #{tpu_custom_call.1} parent=0 // pred_check_branch
    %20 = sbr.rel (0) target = $region21
  $region20: #{tpu_custom_call.1} parent=0 // pred_region
    _
  $region21: #{tpu_custom_call.1} parent=0 // pred_fallthru
    _
  // Predicated region
  $region22: #{tpu_custom_call.1} parent=0 // pred_check
    _
  $region23: #{tpu_custom_call.1} parent=0 // pred_check_branch
    %22 = sbr.rel (0) target = $region25
  $region24: #{tpu_custom_call.1} parent=0 // pred_region
    _
  $region25: #{tpu_custom_call.1} parent=0 // pred_fallthru
    _
  %p23 = scmp.eq.s32.totalorder 0, 0
  // Predicated region
  $region26: #{tpu_custom_call.1} parent=0 // pred_check
    %p24 = pneg %p23
  $region27: #{tpu_custom_call.1} parent=0 // pred_check_branch
    %26 = sbr.rel (%p24) target = $region29
  $region28: #{tpu_custom_call.1} parent=0 // pred_region
    %vm27 = vcmask 7168
    %28 = vst.msk [vmem:[#allocation2] sm:$0xff] %vm27, -inf
    %29 = vst.msk [vmem:[#allocation2 + $0x8] sm:$0xff] %vm27, -inf
    %30 = vst.msk [vmem:[#allocation2 + $0x10] sm:$0xff] %vm27, -inf
    %31 = vst.msk [vmem:[#allocation2 + $0x18] sm:$0xff] %vm27, -inf
    %32 = vst.msk [vmem:[#allocation2 + $0x20] sm:$0xff] %vm27, -inf
    %33 = vst.msk [vmem:[#allocation2 + $0x28] sm:$0xff] %vm27, -inf
    %34 = vst.msk [vmem:[#allocation2 + $0x30] sm:$0xff] %vm27, -inf
    %35 = vst.msk [vmem:[#allocation2 + $0x38] sm:$0xff] %vm27, -inf
    %36 = vst.msk [vmem:[#allocation2 + $0x40] sm:$0xff] %vm27, -inf
    %37 = vst.msk [vmem:[#allocation2 + $0x48] sm:$0xff] %vm27, -inf
    %38 = vst.msk [vmem:[#allocation2 + $0x50] sm:$0xff] %vm27, -inf
    %39 = vst.msk [vmem:[#allocation2 + $0x58] sm:$0xff] %vm27, -inf
    %40 = vst.msk [vmem:[#allocation2 + $0x60] sm:$0xff] %vm27, -inf
    %41 = vst.msk [vmem:[#allocation2 + $0x68] sm:$0xff] %vm27, -inf
    %42 = vst.msk [vmem:[#allocation2 + $0x70] sm:$0xff] %vm27, -inf
    %43 = vst.msk [vmem:[#allocation2 + $0x78] sm:$0xff] %vm27, -inf
    %44 = vst.msk [vmem:[#allocation3] sm:$0xff] %vm27, 0.0
    %45 = vst.msk [vmem:[#allocation3 + $0x8] sm:$0xff] %vm27, 0.0
    %46 = vst.msk [vmem:[#allocation3 + $0x10] sm:$0xff] %vm27, 0.0
    %47 = vst.msk [vmem:[#allocation3 + $0x18] sm:$0xff] %vm27, 0.0
    %48 = vst.msk [vmem:[#allocation3 + $0x20] sm:$0xff] %vm27, 0.0
    %49 = vst.msk [vmem:[#allocation3 + $0x28] sm:$0xff] %vm27, 0.0
    %50 = vst.msk [vmem:[#allocation3 + $0x30] sm:$0xff] %vm27, 0.0
    %51 = vst.msk [vmem:[#allocation3 + $0x38] sm:$0xff] %vm27, 0.0
    %52 = vst.msk [vmem:[#allocation3 + $0x40] sm:$0xff] %vm27, 0.0
    %53 = vst.msk [vmem:[#allocation3 + $0x48] sm:$0xff] %vm27, 0.0
    %54 = vst.msk [vmem:[#allocation3 + $0x50] sm:$0xff] %vm27, 0.0
    %55 = vst.msk [vmem:[#allocation3 + $0x58] sm:$0xff] %vm27, 0.0
    %56 = vst.msk [vmem:[#allocation3 + $0x60] sm:$0xff] %vm27, 0.0
    %57 = vst.msk [vmem:[#allocation3 + $0x68] sm:$0xff] %vm27, 0.0
    %58 = vst.msk [vmem:[#allocation3 + $0x70] sm:$0xff] %vm27, 0.0
    %59 = vst.msk [vmem:[#allocation3 + $0x78] sm:$0xff] %vm27, 0.0
    %60 = vst.msk [vmem:[#allocation4] sm:$0xff] %vm27, 0.0
    %61 = vst.msk [vmem:[#allocation4 + $0x8] sm:$0xff] %vm27, 0.0
    %62 = vst.msk [vmem:[#allocation4 + $0x10] sm:$0xff] %vm27, 0.0
    %63 = vst.msk [vmem:[#allocation4 + $0x18] sm:$0xff] %vm27, 0.0
    %64 = vst.msk [vmem:[#allocation4 + $0x20] sm:$0xff] %vm27, 0.0
    %65 = vst.msk [vmem:[#allocation4 + $0x28] sm:$0xff] %vm27, 0.0
    %66 = vst.msk [vmem:[#allocation4 + $0x30] sm:$0xff] %vm27, 0.0
    %67 = vst.msk [vmem:[#allocation4 + $0x38] sm:$0xff] %vm27, 0.0
    %68 = vst.msk [vmem:[#allocation4 + $0x40] sm:$0xff] %vm27, 0.0
    %69 = vst.msk [vmem:[#allocation4 + $0x48] sm:$0xff] %vm27, 0.0
    %70 = vst.msk [vmem:[#allocation4 + $0x50] sm:$0xff] %vm27, 0.0
    %71 = vst.msk [vmem:[#allocation4 + $0x58] sm:$0xff] %vm27, 0.0
    %72 = vst.msk [vmem:[#allocation4 + $0x60] sm:$0xff] %vm27, 0.0
    %73 = vst.msk [vmem:[#allocation4 + $0x68] sm:$0xff] %vm27, 0.0
    %74 = vst.msk [vmem:[#allocation4 + $0x70] sm:$0xff] %vm27, 0.0
    %75 = vst.msk [vmem:[#allocation4 + $0x78] sm:$0xff] %vm27, 0.0
  $region29: #{tpu_custom_call.1} parent=0 // pred_fallthru
    _
  %v76 = vld [vmem:[%s4] sm:$0xff]
  %v77 = vld [vmem:[%s4 + $0x8] sm:$0xff]
  %v78 = vld [vmem:[%s4 + $0x10] sm:$0xff]
  %v79 = vld [vmem:[%s4 + $0x18] sm:$0xff]
  %v80 = vld [vmem:[%s4 + $0x20] sm:$0xff]
  %v81 = vld [vmem:[%s4 + $0x28] sm:$0xff]
  %v82 = vld [vmem:[%s4 + $0x30] sm:$0xff]
  %v83 = vld [vmem:[%s4 + $0x38] sm:$0xff]
  %v84 = vld [vmem:[%s4 + $0x40] sm:$0xff]
  %v85 = vld [vmem:[%s4 + $0x48] sm:$0xff]
  %v86 = vld [vmem:[%s4 + $0x50] sm:$0xff]
  %v87 = vld [vmem:[%s4 + $0x58] sm:$0xff]
  %v88 = vld [vmem:[%s4 + $0x60] sm:$0xff]
  %v89 = vld [vmem:[%s4 + $0x68] sm:$0xff]
  %v90 = vld [vmem:[%s4 + $0x70] sm:$0xff]
  %v91 = vld [vmem:[%s4 + $0x78] sm:$0xff]
  %v92 = vld [vmem:[%s5] sm:$0xff]
  %v93 = vld [vmem:[%s5 + $0x8] sm:$0xff]
  %v94 = vld [vmem:[%s5 + $0x10] sm:$0xff]
  %v95 = vld [vmem:[%s5 + $0x18] sm:$0xff]
  %v96 = vld [vmem:[%s5 + $0x20] sm:$0xff]
  %v97 = vld [vmem:[%s5 + $0x28] sm:$0xff]
  %v98 = vld [vmem:[%s5 + $0x30] sm:$0xff]
  %v99 = vld [vmem:[%s5 + $0x38] sm:$0xff]
  %v100 = vld [vmem:[%s5 + $0x40] sm:$0xff]
  %v101 = vld [vmem:[%s5 + $0x48] sm:$0xff]
  %v102 = vld [vmem:[%s5 + $0x50] sm:$0xff]
  %v103 = vld [vmem:[%s5 + $0x58] sm:$0xff]
  %v104 = vld [vmem:[%s5 + $0x60] sm:$0xff]
  %v105 = vld [vmem:[%s5 + $0x68] sm:$0xff]
  %v106 = vld [vmem:[%s5 + $0x70] sm:$0xff]
  %v107 = vld [vmem:[%s5 + $0x78] sm:$0xff]
  %108 = vmatprep.subr.mxu0 0.0
  %109 = vmatpush1.xpose.msra.mxu0 %v92
  %110 = vmatprep.subr.mxu0 0.0
  %111 = vmatpush1.xpose.msra.mxu0 %v93
  %112 = vmatprep.subr.mxu0 0.0
  %113 = vmatpush1.xpose.msra.mxu0 %v94
  %114 = vmatprep.subr.mxu0 0.0
  %115 = vmatpush1.xpose.msra.mxu0 %v95
  %116 = vmatprep.subr.mxu0 0.0
  %117 = vmatpush1.xpose.msra.mxu0 %v96
  %118 = vmatprep.subr.mxu0 0.0
  %119 = vmatpush1.xpose.msra.mxu0 %v97
  %120 = vmatprep.subr.mxu0 0.0
  %121 = vmatpush1.xpose.msra.mxu0 %v98
  %122 = vmatprep.subr.mxu0 0.0
  %123 = vmatpush1.xpose.msra.mxu0 %v99
  %124 = vmatprep.subr.mxu0 0.0
  %125 = vmatpush1.xpose.msra.mxu0 %v100
  %126 = vmatprep.subr.mxu0 0.0
  %127 = vmatpush1.xpose.msra.mxu0 %v101
  %128 = vmatprep.subr.mxu0 0.0
  %129 = vmatpush1.xpose.msra.mxu0 %v102
  %130 = vmatprep.subr.mxu0 0.0
  %131 = vmatpush1.xpose.msra.mxu0 %v103
  %132 = vmatprep.subr.mxu0 0.0
  %133 = vmatpush1.xpose.msra.mxu0 %v104
  %134 = vmatprep.subr.mxu0 0.0
  %135 = vmatpush1.xpose.msra.mxu0 %v105
  %136 = vmatprep.subr.mxu0 0.0
  %137 = vmatpush1.xpose.msra.mxu0 %v106
  %138 = vmatprep.subr.mxu0 0.0
  %139 = vmatpush1.xpose.msra.mxu0 %v107
  %140 = vmatprep.subr.mxu0 0.0
  %141 = vmatpush1.xpose.msra.mxu0 0.0
  %142 = vmatprep.subr.mxu0 0.0
  %143 = vmatpush1.xpose.msra.mxu0 0.0
  %144 = vmatprep.subr.mxu0 0.0
  %145 = vmatpush1.xpose.msra.mxu0 0.0
  %146 = vmatprep.subr.mxu0 0.0
  %147 = vmatpush1.xpose.msra.mxu0 0.0
  %148 = vmatprep.subr.mxu0 0.0
  %149 = vmatpush1.xpose.msra.mxu0 0.0
  %150 = vmatprep.subr.mxu0 0.0
  %151 = vmatpush1.xpose.msra.mxu0 0.0
  %152 = vmatprep.subr.mxu0 0.0
  %153 = vmatpush1.xpose.msra.mxu0 0.0
  %154 = vmatprep.subr.mxu0 0.0
  %155 = vmatpush1.xpose.msra.mxu0 0.0
  %156 = vmatprep.subr.mxu0 0.0
  %157 = vmatpush1.xpose.msra.mxu0 0.0
  %158 = vmatprep.subr.mxu0 0.0
  %159 = vmatpush1.xpose.msra.mxu0 0.0
  %160 = vmatprep.subr.mxu0 0.0
  %161 = vmatpush1.xpose.msra.mxu0 0.0
  %162 = vmatprep.subr.mxu0 0.0
  %163 = vmatpush1.xpose.msra.mxu0 0.0
  %164 = vmatprep.subr.mxu0 0.0
  %165 = vmatpush1.xpose.msra.mxu0 0.0
  %166 = vmatprep.subr.mxu0 0.0
  %167 = vmatpush1.xpose.msra.mxu0 0.0
  %168 = vmatprep.subr.mxu0 0.0
  %169 = vmatpush1.xpose.msra.mxu0 0.0
  %170 = vmatprep.subr.mxu0 0.0
  %171 = vmatpush1.xpose.msra.mxu0 0.0
  %172 = vmatprep.mubr.f32.mxu0 0.0
  %173 = vmatmul.mubr.f32.gmra.mrb[0].mxu0 %v76
  %v174 = vpop.f32.mrb[0].mxu0
  %v175 = vadd.f32 0.0, %v174
  %v176 = vpop.f32.mrb[0].mxu0
  %177 = vmatprep.mubr.f32.mxu0 0.0
  %178 = vmatmul.mubr.f32.gmra.mrb[0].mxu0 %v77
  %v179 = vpop.f32.mrb[0].mxu0
  %v180 = vadd.f32 0.0, %v179
  %v181 = vpop.f32.mrb[0].mxu0
  %182 = vmatprep.mubr.f32.mxu0 0.0
  %183 = vmatmul.mubr.f32.gmra.mrb[0].mxu0 %v78
  %v184 = vpop.f32.mrb[0].mxu0
  %v185 = vadd.f32 0.0, %v184
  %v186 = vpop.f32.mrb[0].mxu0
  %187 = vmatprep.mubr.f32.mxu0 0.0
  %188 = vmatmul.mubr.f32.gmra.mrb[0].mxu0 %v79
  %v189 = vpop.f32.mrb[0].mxu0
  %v190 = vadd.f32 0.0, %v189
  %v191 = vpop.f32.mrb[0].mxu0
  %192 = vmatprep.mubr.f32.mxu0 0.0
  %193 = vmatmul.mubr.f32.gmra.mrb[0].mxu0 %v80
  %v194 = vpop.f32.mrb[0].mxu0
  %v195 = vadd.f32 0.0, %v194
  %v196 = vpop.f32.mrb[0].mxu0
  %197 = vmatprep.mubr.f32.mxu0 0.0
  %198 = vmatmul.mubr.f32.gmra.mrb[0].mxu0 %v81
  %v199 = vpop.f32.mrb[0].mxu0
  %v200 = vadd.f32 0.0, %v199
  %v201 = vpop.f32.mrb[0].mxu0
  %202 = vmatprep.mubr.f32.mxu0 0.0
  %203 = vmatmul.mubr.f32.gmra.mrb[0].mxu0 %v82
  %v204 = vpop.f32.mrb[0].mxu0
  %v205 = vadd.f32 0.0, %v204
  %v206 = vpop.f32.mrb[0].mxu0
  %207 = vmatprep.mubr.f32.mxu0 0.0
  %208 = vmatmul.mubr.f32.gmra.mrb[0].mxu0 %v83
  %v209 = vpop.f32.mrb[0].mxu0
  %v210 = vadd.f32 0.0, %v209
  %v211 = vpop.f32.mrb[0].mxu0
  %212 = vmatprep.mubr.f32.mxu0 0.0
  %213 = vmatmul.mubr.f32.gmra.mrb[0].mxu0 %v84
  %v214 = vpop.f32.mrb[0].mxu0
  %v215 = vadd.f32 0.0, %v214
  %v216 = vpop.f32.mrb[0].mxu0
  %217 = vmatprep.mubr.f32.mxu0 0.0
  %218 = vmatmul.mubr.f32.gmra.mrb[0].mxu0 %v85
  %v219 = vpop.f32.mrb[0].mxu0
  %v220 = vadd.f32 0.0, %v219
  %v221 = vpop.f32.mrb[0].mxu0
  %222 = vmatprep.mubr.f32.mxu0 0.0
  %223 = vmatmul.mubr.f32.gmra.mrb[0].mxu0 %v86
  %v224 = vpop.f32.mrb[0].mxu0
  %v225 = vadd.f32 0.0, %v224
  %v226 = vpop.f32.mrb[0].mxu0
  %227 = vmatprep.mubr.f32.mxu0 0.0
  %228 = vmatmul.mubr.f32.gmra.mrb[0].mxu0 %v87
  %v229 = vpop.f32.mrb[0].mxu0
  %v230 = vadd.f32 0.0, %v229
  %v231 = vpop.f32.mrb[0].mxu0
  %232 = vmatprep.mubr.f32.mxu0 0.0
  %233 = vmatmul.mubr.f32.gmra.mrb[0].mxu0 %v88
  %v234 = vpop.f32.mrb[0].mxu0
  %v235 = vadd.f32 0.0, %v234
  %v236 = vpop.f32.mrb[0].mxu0
  %237 = vmatprep.mubr.f32.mxu0 0.0
  %238 = vmatmul.mubr.f32.gmra.mrb[0].mxu0 %v89
  %v239 = vpop.f32.mrb[0].mxu0
  %v240 = vadd.f32 0.0, %v239
  %v241 = vpop.f32.mrb[0].mxu0
  %242 = vmatprep.mubr.f32.mxu0 0.0
  %243 = vmatmul.mubr.f32.gmra.mrb[0].mxu0 %v90
  %v244 = vpop.f32.mrb[0].mxu0
  %v245 = vadd.f32 0.0, %v244
  %v246 = vpop.f32.mrb[0].mxu0
  %247 = vmatprep.mubr.f32.mxu0 0.0
  %248 = vmatmul.mubr.f32.gmra.mrb[0].mxu0 %v91
  %v249 = vpop.f32.mrb[0].mxu0
  %v250 = vadd.f32 0.0, %v249
  %v251 = vpop.f32.mrb[0].mxu0
  %252 = vdwg.mxu0
  %v253 = vld [vmem:[%s3] sm:$0x1]
  %v255 = vlaneseq
  %v256 = vshrl.u32 %v255, 7
  %v257 = vsub.s32 0, %v256
  %v258 = vrot.slane %v253, %v257
  %v260 = vadd.f32 %v175, %v258
  %v261 = vadd.f32 %v180, %v258
  %v262 = vadd.f32 %v185, %v258
  %v263 = vadd.f32 %v190, %v258
  %v264 = vadd.f32 %v195, %v258
  %v265 = vadd.f32 %v200, %v258
  %v266 = vadd.f32 %v205, %v258
  %v267 = vadd.f32 %v210, %v258
  %v268 = vadd.f32 %v215, %v258
  %v269 = vadd.f32 %v220, %v258
  %v270 = vadd.f32 %v225, %v258
  %v271 = vadd.f32 %v230, %v258
  %v272 = vadd.f32 %v235, %v258
  %v273 = vadd.f32 %v240, %v258
  %v274 = vadd.f32 %v245, %v258
  %v275 = vadd.f32 %v250, %v258
  %v276 = vld [vmem:[#allocation2] sm:$0xff]
  %v277 = vld [vmem:[#allocation2 + $0x8] sm:$0xff]
  %v278 = vld [vmem:[#allocation2 + $0x10] sm:$0xff]
  %v279 = vld [vmem:[#allocation2 + $0x18] sm:$0xff]
  %v280 = vld [vmem:[#allocation2 + $0x20] sm:$0xff]
  %v281 = vld [vmem:[#allocation2 + $0x28] sm:$0xff]
  %v282 = vld [vmem:[#allocation2 + $0x30] sm:$0xff]
  %v283 = vld [vmem:[#allocation2 + $0x38] sm:$0xff]
  %v284 = vld [vmem:[#allocation2 + $0x40] sm:$0xff]
  %v285 = vld [vmem:[#allocation2 + $0x48] sm:$0xff]
  %v286 = vld [vmem:[#allocation2 + $0x50] sm:$0xff]
  %v287 = vld [vmem:[#allocation2 + $0x58] sm:$0xff]
  %v288 = vld [vmem:[#allocation2 + $0x60] sm:$0xff]
  %v289 = vld [vmem:[#allocation2 + $0x68] sm:$0xff]
  %v290 = vld [vmem:[#allocation2 + $0x70] sm:$0xff]
  %v291 = vld [vmem:[#allocation2 + $0x78] sm:$0xff]
  %292 = vmax.xlane.f32.xlu0 %v260
  %v293 = vpop.xlane.xlu0 %292
  %294 = vmax.xlane.f32.xlu0 %v261
  %v295 = vpop.xlane.xlu0 %294
  %296 = vmax.xlane.f32.xlu0 %v262
  %v297 = vpop.xlane.xlu0 %296
  %298 = vmax.xlane.f32.xlu0 %v263
  %v299 = vpop.xlane.xlu0 %298
  %300 = vmax.xlane.f32.xlu0 %v264
  %v301 = vpop.xlane.xlu0 %300
  %302 = vmax.xlane.f32.xlu0 %v265
  %v303 = vpop.xlane.xlu0 %302
  %304 = vmax.xlane.f32.xlu0 %v266
  %v305 = vpop.xlane.xlu0 %304
  %306 = vmax.xlane.f32.xlu0 %v267
  %v307 = vpop.xlane.xlu0 %306
  %308 = vmax.xlane.f32.xlu0 %v268
  %v309 = vpop.xlane.xlu0 %308
  %310 = vmax.xlane.f32.xlu0 %v269
  %v311 = vpop.xlane.xlu0 %310
  %312 = vmax.xlane.f32.xlu0 %v270
  %v313 = vpop.xlane.xlu0 %312
  %314 = vmax.xlane.f32.xlu0 %v271
  %v315 = vpop.xlane.xlu0 %314
  %316 = vmax.xlane.f32.xlu0 %v272
  %v317 = vpop.xlane.xlu0 %316
  %318 = vmax.xlane.f32.xlu0 %v273
  %v319 = vpop.xlane.xlu0 %318
  %320 = vmax.xlane.f32.xlu0 %v274
  %v321 = vpop.xlane.xlu0 %320
  %322 = vmax.xlane.f32.xlu0 %v275
  %v323 = vpop.xlane.xlu0 %322
  %v324 = vmax.f32 %v276, %v293
  %v325 = vmax.f32 %v277, %v295
  %v326 = vmax.f32 %v278, %v297
  %v327 = vmax.f32 %v279, %v299
  %v328 = vmax.f32 %v280, %v301
  %v329 = vmax.f32 %v281, %v303
  %v330 = vmax.f32 %v282, %v305
  %v331 = vmax.f32 %v283, %v307
  %v332 = vmax.f32 %v284, %v309
  %v333 = vmax.f32 %v285, %v311
  %v334 = vmax.f32 %v286, %v313
  %v335 = vmax.f32 %v287, %v315
  %v336 = vmax.f32 %v288, %v317
  %v337 = vmax.f32 %v289, %v319
  %v338 = vmax.f32 %v290, %v321
  %v339 = vmax.f32 %v291, %v323
  %v340 = vsub.f32 %v276, %v324
  %v341 = vsub.f32 %v277, %v325
  %v342 = vsub.f32 %v278, %v326
  %v343 = vsub.f32 %v279, %v327
  %v344 = vsub.f32 %v280, %v328
  %v345 = vsub.f32 %v281, %v329
  %v346 = vsub.f32 %v282, %v330
  %v347 = vsub.f32 %v283, %v331
  %v348 = vsub.f32 %v284, %v332
  %v349 = vsub.f32 %v285, %v333
  %v350 = vsub.f32 %v286, %v334
  %v351 = vsub.f32 %v287, %v335
  %v352 = vsub.f32 %v288, %v336
  %v353 = vsub.f32 %v289, %v337
  %v354 = vsub.f32 %v290, %v338
  %v355 = vsub.f32 %v291, %v339
  %v356 = vmul.f32 %v340, 1.442695
  %v357 = vpow.pop %v356
  %v358 = vmul.f32 %v341, 1.442695
  %v359 = vpow.pop %v358
  %v360 = vmul.f32 %v342, 1.442695
  %v361 = vpow.pop %v360
  %v362 = vmul.f32 %v343, 1.442695
  %v363 = vpow.pop %v362
  %v364 = vmul.f32 %v344, 1.442695
  %v365 = vpow.pop %v364
  %v366 = vmul.f32 %v345, 1.442695
  %v367 = vpow.pop %v366
  %v368 = vmul.f32 %v346, 1.442695
  %v369 = vpow.pop %v368
  %v370 = vmul.f32 %v347, 1.442695
  %v371 = vpow.pop %v370
  %v372 = vmul.f32 %v348, 1.442695
  %v373 = vpow.pop %v372
  %v374 = vmul.f32 %v349, 1.442695
  %v375 = vpow.pop %v374
  %v376 = vmul.f32 %v350, 1.442695
  %v377 = vpow.pop %v376
  %v378 = vmul.f32 %v351, 1.442695
  %v379 = vpow.pop %v378
  %v380 = vmul.f32 %v352, 1.442695
  %v381 = vpow.pop %v380
  %v382 = vmul.f32 %v353, 1.442695
  %v383 = vpow.pop %v382
  %v384 = vmul.f32 %v354, 1.442695
  %v385 = vpow.pop %v384
  %v386 = vmul.f32 %v355, 1.442695
  %v387 = vpow.pop %v386
  %vm388 = vcmask 7168
  %389 = vst.msk [vmem:[#allocation2] sm:$0xff] %vm388, %v324
  %390 = vst.msk [vmem:[#allocation2 + $0x8] sm:$0xff] %vm388, %v325
  %391 = vst.msk [vmem:[#allocation2 + $0x10] sm:$0xff] %vm388, %v326
  %392 = vst.msk [vmem:[#allocation2 + $0x18] sm:$0xff] %vm388, %v327
  %393 = vst.msk [vmem:[#allocation2 + $0x20] sm:$0xff] %vm388, %v328
  %394 = vst.msk [vmem:[#allocation2 + $0x28] sm:$0xff] %vm388, %v329
  %395 = vst.msk [vmem:[#allocation2 + $0x30] sm:$0xff] %vm388, %v330
  %396 = vst.msk [vmem:[#allocation2 + $0x38] sm:$0xff] %vm388, %v331
  %397 = vst.msk [vmem:[#allocation2 + $0x40] sm:$0xff] %vm388, %v332
  %398 = vst.msk [vmem:[#allocation2 + $0x48] sm:$0xff] %vm388, %v333
  %399 = vst.msk [vmem:[#allocation2 + $0x50] sm:$0xff] %vm388, %v334
  %400 = vst.msk [vmem:[#allocation2 + $0x58] sm:$0xff] %vm388, %v335
  %401 = vst.msk [vmem:[#allocation2 + $0x60] sm:$0xff] %vm388, %v336
  %402 = vst.msk [vmem:[#allocation2 + $0x68] sm:$0xff] %vm388, %v337
  %403 = vst.msk [vmem:[#allocation2 + $0x70] sm:$0xff] %vm388, %v338
  %404 = vst.msk [vmem:[#allocation2 + $0x78] sm:$0xff] %vm388, %v339
  %v405 = vld [vmem:[#allocation3] sm:$0xff]
  %v406 = vld [vmem:[#allocation3 + $0x8] sm:$0xff]
  %v407 = vld [vmem:[#allocation3 + $0x10] sm:$0xff]
  %v408 = vld [vmem:[#allocation3 + $0x18] sm:$0xff]
  %v409 = vld [vmem:[#allocation3 + $0x20] sm:$0xff]
  %v410 = vld [vmem:[#allocation3 + $0x28] sm:$0xff]
  %v411 = vld [vmem:[#allocation3 + $0x30] sm:$0xff]
  %v412 = vld [vmem:[#allocation3 + $0x38] sm:$0xff]
  %v413 = vld [vmem:[#allocation3 + $0x40] sm:$0xff]
  %v414 = vld [vmem:[#allocation3 + $0x48] sm:$0xff]
  %v415 = vld [vmem:[#allocation3 + $0x50] sm:$0xff]
  %v416 = vld [vmem:[#allocation3 + $0x58] sm:$0xff]
  %v417 = vld [vmem:[#allocation3 + $0x60] sm:$0xff]
  %v418 = vld [vmem:[#allocation3 + $0x68] sm:$0xff]
  %v419 = vld [vmem:[#allocation3 + $0x70] sm:$0xff]
  %v420 = vld [vmem:[#allocation3 + $0x78] sm:$0xff]
  %v421 = vmul.f32 %v357, %v405
  %v422 = vmul.f32 %v359, %v406
  %v423 = vmul.f32 %v361, %v407
  %v424 = vmul.f32 %v363, %v408
  %v425 = vmul.f32 %v365, %v409
  %v426 = vmul.f32 %v367, %v410
  %v427 = vmul.f32 %v369, %v411
  %v428 = vmul.f32 %v371, %v412
  %v429 = vmul.f32 %v373, %v413
  %v430 = vmul.f32 %v375, %v414
  %v431 = vmul.f32 %v377, %v415
  %v432 = vmul.f32 %v379, %v416
  %v433 = vmul.f32 %v381, %v417
  %v434 = vmul.f32 %v383, %v418
  %v435 = vmul.f32 %v385, %v419
  %v436 = vmul.f32 %v387, %v420
  %438 = vset.pattern.permute.xlu0 0
  %439 = vperm.xlu0 %438, %v324
  %v440 = vpop.permute.xlu0 %439
  %443 = vset.pattern.permute.xlu0 0
  %444 = vperm.xlu0 %443, %v325
  %v445 = vpop.permute.xlu0 %444
  %448 = vset.pattern.permute.xlu0 0
  %449 = vperm.xlu0 %448, %v326
  %v450 = vpop.permute.xlu0 %449
  %453 = vset.pattern.permute.xlu0 0
  %454 = vperm.xlu0 %453, %v327
  %v455 = vpop.permute.xlu0 %454
  %458 = vset.pattern.permute.xlu0 0
  %459 = vperm.xlu0 %458, %v328
  %v460 = vpop.permute.xlu0 %459
  %463 = vset.pattern.permute.xlu0 0
  %464 = vperm.xlu0 %463, %v329
  %v465 = vpop.permute.xlu0 %464
  %468 = vset.pattern.permute.xlu0 0
  %469 = vperm.xlu0 %468, %v330
  %v470 = vpop.permute.xlu0 %469
  %473 = vset.pattern.permute.xlu0 0
  %474 = vperm.xlu0 %473, %v331
  %v475 = vpop.permute.xlu0 %474
  %478 = vset.pattern.permute.xlu0 0
  %479 = vperm.xlu0 %478, %v332
  %v480 = vpop.permute.xlu0 %479
  %483 = vset.pattern.permute.xlu0 0
  %484 = vperm.xlu0 %483, %v333
  %v485 = vpop.permute.xlu0 %484
  %488 = vset.pattern.permute.xlu0 0
  %489 = vperm.xlu0 %488, %v334
  %v490 = vpop.permute.xlu0 %489
  %493 = vset.pattern.permute.xlu0 0
  %494 = vperm.xlu0 %493, %v335
  %v495 = vpop.permute.xlu0 %494
  %498 = vset.pattern.permute.xlu0 0
  %499 = vperm.xlu0 %498, %v336
  %v500 = vpop.permute.xlu0 %499
  %503 = vset.pattern.permute.xlu0 0
  %504 = vperm.xlu0 %503, %v337
  %v505 = vpop.permute.xlu0 %504
  %508 = vset.pattern.permute.xlu0 0
  %509 = vperm.xlu0 %508, %v338
  %v510 = vpop.permute.xlu0 %509
  %513 = vset.pattern.permute.xlu0 0
  %514 = vperm.xlu0 %513, %v339
  %v515 = vpop.permute.xlu0 %514
  %v517 = vsub.f32 %v260, %v440
  %v518 = vsub.f32 %v261, %v445
  %v519 = vsub.f32 %v262, %v450
  %v520 = vsub.f32 %v263, %v455
  %v521 = vsub.f32 %v264, %v460
  %v522 = vsub.f32 %v265, %v465
  %v523 = vsub.f32 %v266, %v470
  %v524 = vsub.f32 %v267, %v475
  %v525 = vsub.f32 %v268, %v480
  %v526 = vsub.f32 %v269, %v485
  %v527 = vsub.f32 %v270, %v490
  %v528 = vsub.f32 %v271, %v495
  %v529 = vsub.f32 %v272, %v500
  %v530 = vsub.f32 %v273, %v505
  %v531 = vsub.f32 %v274, %v510
  %v532 = vsub.f32 %v275, %v515
  %v533 = vmul.f32 %v517, 1.442695
  %v534 = vpow.pop %v533
  %v535 = vmul.f32 %v518, 1.442695
  %v536 = vpow.pop %v535
  %v537 = vmul.f32 %v519, 1.442695
  %v538 = vpow.pop %v537
  %v539 = vmul.f32 %v520, 1.442695
  %v540 = vpow.pop %v539
  %v541 = vmul.f32 %v521, 1.442695
  %v542 = vpow.pop %v541
  %v543 = vmul.f32 %v522, 1.442695
  %v544 = vpow.pop %v543
  %v545 = vmul.f32 %v523, 1.442695
  %v546 = vpow.pop %v545
  %v547 = vmul.f32 %v524, 1.442695
  %v548 = vpow.pop %v547
  %v549 = vmul.f32 %v525, 1.442695
  %v550 = vpow.pop %v549
  %v551 = vmul.f32 %v526, 1.442695
  %v552 = vpow.pop %v551
  %v553 = vmul.f32 %v527, 1.442695
  %v554 = vpow.pop %v553
  %v555 = vmul.f32 %v528, 1.442695
  %v556 = vpow.pop %v555
  %v557 = vmul.f32 %v529, 1.442695
  %v558 = vpow.pop %v557
  %v559 = vmul.f32 %v530, 1.442695
  %v560 = vpow.pop %v559
  %v561 = vmul.f32 %v531, 1.442695
  %v562 = vpow.pop %v561
  %v563 = vmul.f32 %v532, 1.442695
  %v564 = vpow.pop %v563
  %v565 = vld [vmem:[%s0] sm:$0xff]
  %v566 = vld [vmem:[%s0 + $0x8] sm:$0xff]
  %v567 = vld [vmem:[%s0 + $0x10] sm:$0xff]
  %v568 = vld [vmem:[%s0 + $0x18] sm:$0xff]
  %v569 = vld [vmem:[%s0 + $0x20] sm:$0xff]
  %v570 = vld [vmem:[%s0 + $0x28] sm:$0xff]
  %v571 = vld [vmem:[%s0 + $0x30] sm:$0xff]
  %v572 = vld [vmem:[%s0 + $0x38] sm:$0xff]
  %v573 = vld [vmem:[%s0 + $0x40] sm:$0xff]
  %v574 = vld [vmem:[%s0 + $0x48] sm:$0xff]
  %v575 = vld [vmem:[%s0 + $0x50] sm:$0xff]
  %v576 = vld [vmem:[%s0 + $0x58] sm:$0xff]
  %v577 = vld [vmem:[%s0 + $0x60] sm:$0xff]
  %v578 = vld [vmem:[%s0 + $0x68] sm:$0xff]
  %v579 = vld [vmem:[%s0 + $0x70] sm:$0xff]
  %v580 = vld [vmem:[%s0 + $0x78] sm:$0xff]
  %v581 = vld [vmem:[%s1] sm:$0x1]
  %582 = vset.pattern.permute.xlu0 0
  %583 = vperm.xlu0 %582, %v565
  %v584 = vpop.permute.xlu0 %583
  %585 = vset.pattern.permute.xlu0 0
  %586 = vperm.xlu0 %585, %v566
  %v587 = vpop.permute.xlu0 %586
  %588 = vset.pattern.permute.xlu0 0
  %589 = vperm.xlu0 %588, %v567
  %v590 = vpop.permute.xlu0 %589
  %591 = vset.pattern.permute.xlu0 0
  %592 = vperm.xlu0 %591, %v568
  %v593 = vpop.permute.xlu0 %592
  %594 = vset.pattern.permute.xlu0 0
  %595 = vperm.xlu0 %594, %v569
  %v596 = vpop.permute.xlu0 %595
  %597 = vset.pattern.permute.xlu0 0
  %598 = vperm.xlu0 %597, %v570
  %v599 = vpop.permute.xlu0 %598
  %600 = vset.pattern.permute.xlu0 0
  %601 = vperm.xlu0 %600, %v571
  %v602 = vpop.permute.xlu0 %601
  %603 = vset.pattern.permute.xlu0 0
  %604 = vperm.xlu0 %603, %v572
  %v605 = vpop.permute.xlu0 %604
  %606 = vset.pattern.permute.xlu0 0
  %607 = vperm.xlu0 %606, %v573
  %v608 = vpop.permute.xlu0 %607
  %609 = vset.pattern.permute.xlu0 0
  %610 = vperm.xlu0 %609, %v574
  %v611 = vpop.permute.xlu0 %610
  %612 = vset.pattern.permute.xlu0 0
  %613 = vperm.xlu0 %612, %v575
  %v614 = vpop.permute.xlu0 %613
  %615 = vset.pattern.permute.xlu0 0
  %616 = vperm.xlu0 %615, %v576
  %v617 = vpop.permute.xlu0 %616
  %618 = vset.pattern.permute.xlu0 0
  %619 = vperm.xlu0 %618, %v577
  %v620 = vpop.permute.xlu0 %619
  %621 = vset.pattern.permute.xlu0 0
  %622 = vperm.xlu0 %621, %v578
  %v623 = vpop.permute.xlu0 %622
  %624 = vset.pattern.permute.xlu0 0
  %625 = vperm.xlu0 %624, %v579
  %v626 = vpop.permute.xlu0 %625
  %627 = vset.pattern.permute.xlu0 0
  %628 = vperm.xlu0 %627, %v580
  %v629 = vpop.permute.xlu0 %628
  %v630 = vlaneseq
  %v631 = vshrl.u32 %v630, 7
  %v632 = vsub.s32 0, %v631
  %v633 = vrot.slane %v581, %v632
  %vm634 = vcmp.eq.s32.totalorder %v584, %v633
  %vm635 = vcmp.eq.s32.totalorder %v587, %v633
  %vm636 = vcmp.eq.s32.totalorder %v590, %v633
  %vm637 = vcmp.eq.s32.totalorder %v593, %v633
  %vm638 = vcmp.eq.s32.totalorder %v596, %v633
  %vm639 = vcmp.eq.s32.totalorder %v599, %v633
  %vm640 = vcmp.eq.s32.totalorder %v602, %v633
  %vm641 = vcmp.eq.s32.totalorder %v605, %v633
  %vm642 = vcmp.eq.s32.totalorder %v608, %v633
  %vm643 = vcmp.eq.s32.totalorder %v611, %v633
  %vm644 = vcmp.eq.s32.totalorder %v614, %v633
  %vm645 = vcmp.eq.s32.totalorder %v617, %v633
  %vm646 = vcmp.eq.s32.totalorder %v620, %v633
  %vm647 = vcmp.eq.s32.totalorder %v623, %v633
  %vm648 = vcmp.eq.s32.totalorder %v626, %v633
  %vm649 = vcmp.eq.s32.totalorder %v629, %v633
  %s650 = smul.u32 0, 128
  %s651 = smul.u32 0, 128
  %s652 = ssub.s32 %s650, %s651
  %p653 = scmp.gt.s32.totalorder %s652, 4294967168
  %p654 = scmp.lt.s32.totalorder %s652, 128
  %p655 = pnand %p653, %p654
  %p656 = pneg %p655
  // Predicated region
  $region30: #{tpu_custom_call.1} parent=0 // pred_check
    _
  $region31: #{tpu_custom_call.1} parent=0 // pred_check_branch
    %658 = sbr.rel (%p655) target = $region33
  $region32: #{tpu_custom_call.1} parent=0 // pred_region
    %v659 = vlaneseq
    %v660 = vshrl.u32 %v659, 7
    %v661 = vadd.s32 %v660, 8
    %v662 = vadd.s32 %v660, 16
    %v663 = vadd.s32 %v660, 24
    %v664 = vadd.s32 %v660, 32
    %v665 = vadd.s32 %v660, 40
    %v666 = vadd.s32 %v660, 48
    %v667 = vadd.s32 %v660, 56
    %v668 = vadd.s32 %v660, 64
    %v669 = vadd.s32 %v660, 72
    %v670 = vadd.s32 %v660, 80
    %v671 = vadd.s32 %v660, 88
    %v672 = vadd.s32 %v660, 96
    %v673 = vadd.s32 %v660, 104
    %v674 = vadd.s32 %v660, 112
    %v675 = vadd.s32 %v660, 120
    %v676 = vlaneseq
    %v677 = vand.u32 %v676, 127
    %v678 = vsub.s32 %v677, %v660
    %v679 = vsub.s32 %v677, %v661
    %v680 = vsub.s32 %v677, %v662
    %v681 = vsub.s32 %v677, %v663
    %v682 = vsub.s32 %v677, %v664
    %v683 = vsub.s32 %v677, %v665
    %v684 = vsub.s32 %v677, %v666
    %v685 = vsub.s32 %v677, %v667
    %v686 = vsub.s32 %v677, %v668
    %v687 = vsub.s32 %v677, %v669
    %v688 = vsub.s32 %v677, %v670
    %v689 = vsub.s32 %v677, %v671
    %v690 = vsub.s32 %v677, %v672
    %v691 = vsub.s32 %v677, %v673
    %v692 = vsub.s32 %v677, %v674
    %v693 = vsub.s32 %v677, %v675
    %v694 = vstv %s652
    %vm695 = vcmp.ne.s32.totalorder %v678, %v694
    %vm696 = vcmp.ne.s32.totalorder %v679, %v694
    %vm697 = vcmp.ne.s32.totalorder %v680, %v694
    %vm698 = vcmp.ne.s32.totalorder %v681, %v694
    %vm699 = vcmp.ne.s32.totalorder %v682, %v694
    %vm700 = vcmp.ne.s32.totalorder %v683, %v694
    %vm701 = vcmp.ne.s32.totalorder %v684, %v694
    %vm702 = vcmp.ne.s32.totalorder %v685, %v694
    %vm703 = vcmp.ne.s32.totalorder %v686, %v694
    %vm704 = vcmp.ne.s32.totalorder %v687, %v694
    %vm705 = vcmp.ne.s32.totalorder %v688, %v694
    %vm706 = vcmp.ne.s32.totalorder %v689, %v694
    %vm707 = vcmp.ne.s32.totalorder %v690, %v694
    %vm708 = vcmp.ne.s32.totalorder %v691, %v694
    %vm709 = vcmp.ne.s32.totalorder %v692, %v694
    %vm710 = vcmp.ne.s32.totalorder %v693, %v694
    %v711 = vsel %vm695, %v534, 0.0
    %v712 = vsel %vm696, %v536, 0.0
    %v713 = vsel %vm697, %v538, 0.0
    %v714 = vsel %vm698, %v540, 0.0
    %v715 = vsel %vm699, %v542, 0.0
    %v716 = vsel %vm700, %v544, 0.0
    %v717 = vsel %vm701, %v546, 0.0
    %v718 = vsel %vm702, %v548, 0.0
    %v719 = vsel %vm703, %v550, 0.0
    %v720 = vsel %vm704, %v552, 0.0
    %v721 = vsel %vm705, %v554, 0.0
    %v722 = vsel %vm706, %v556, 0.0
    %v723 = vsel %vm707, %v558, 0.0
    %v724 = vsel %vm708, %v560, 0.0
    %v725 = vsel %vm709, %v562, 0.0
    %v726 = vsel %vm710, %v564, 0.0
    %727 = vadd.xlane.f32.xlu0 %v711
    %v728 = vpop.xlane.xlu0 %727
    %729 = vadd.xlane.f32.xlu0 %v712
    %v730 = vpop.xlane.xlu0 %729
    %731 = vadd.xlane.f32.xlu0 %v713
    %v732 = vpop.xlane.xlu0 %731
    %733 = vadd.xlane.f32.xlu0 %v714
    %v734 = vpop.xlane.xlu0 %733
    %735 = vadd.xlane.f32.xlu0 %v715
    %v736 = vpop.xlane.xlu0 %735
    %737 = vadd.xlane.f32.xlu0 %v716
    %v738 = vpop.xlane.xlu0 %737
    %739 = vadd.xlane.f32.xlu0 %v717
    %v740 = vpop.xlane.xlu0 %739
    %741 = vadd.xlane.f32.xlu0 %v718
    %v742 = vpop.xlane.xlu0 %741
    %743 = vadd.xlane.f32.xlu0 %v719
    %v744 = vpop.xlane.xlu0 %743
    %745 = vadd.xlane.f32.xlu0 %v720
    %v746 = vpop.xlane.xlu0 %745
    %747 = vadd.xlane.f32.xlu0 %v721
    %v748 = vpop.xlane.xlu0 %747
    %749 = vadd.xlane.f32.xlu0 %v722
    %v750 = vpop.xlane.xlu0 %749
    %751 = vadd.xlane.f32.xlu0 %v723
    %v752 = vpop.xlane.xlu0 %751
    %753 = vadd.xlane.f32.xlu0 %v724
    %v754 = vpop.xlane.xlu0 %753
    %755 = vadd.xlane.f32.xlu0 %v725
    %v756 = vpop.xlane.xlu0 %755
    %757 = vadd.xlane.f32.xlu0 %v726
    %v758 = vpop.xlane.xlu0 %757
    %v759 = vadd.f32 %v421, %v728
    %v760 = vadd.f32 %v422, %v730
    %v761 = vadd.f32 %v423, %v732
    %v762 = vadd.f32 %v424, %v734
    %v763 = vadd.f32 %v425, %v736
    %v764 = vadd.f32 %v426, %v738
    %v765 = vadd.f32 %v427, %v740
    %v766 = vadd.f32 %v428, %v742
    %v767 = vadd.f32 %v429, %v744
    %v768 = vadd.f32 %v430, %v746
    %v769 = vadd.f32 %v431, %v748
    %v770 = vadd.f32 %v432, %v750
    %v771 = vadd.f32 %v433, %v752
    %v772 = vadd.f32 %v434, %v754
    %v773 = vadd.f32 %v435, %v756
    %v774 = vadd.f32 %v436, %v758
    %775 = vst.msk [vmem:[#allocation3] sm:$0xff] %vm388, %v759
    %776 = vst.msk [vmem:[#allocation3 + $0x8] sm:$0xff] %vm388, %v760
    %777 = vst.msk [vmem:[#allocation3 + $0x10] sm:$0xff] %vm388, %v761
    %778 = vst.msk [vmem:[#allocation3 + $0x18] sm:$0xff] %vm388, %v762
    %779 = vst.msk [vmem:[#allocation3 + $0x20] sm:$0xff] %vm388, %v763
    %780 = vst.msk [vmem:[#allocation3 + $0x28] sm:$0xff] %vm388, %v764
    %781 = vst.msk [vmem:[#allocation3 + $0x30] sm:$0xff] %vm388, %v765
    %782 = vst.msk [vmem:[#allocation3 + $0x38] sm:$0xff] %vm388, %v766
    %783 = vst.msk [vmem:[#allocation3 + $0x40] sm:$0xff] %vm388, %v767
    %784 = vst.msk [vmem:[#allocation3 + $0x48] sm:$0xff] %vm388, %v768
    %785 = vst.msk [vmem:[#allocation3 + $0x50] sm:$0xff] %vm388, %v769
    %786 = vst.msk [vmem:[#allocation3 + $0x58] sm:$0xff] %vm388, %v770
    %787 = vst.msk [vmem:[#allocation3 + $0x60] sm:$0xff] %vm388, %v771
    %788 = vst.msk [vmem:[#allocation3 + $0x68] sm:$0xff] %vm388, %v772
    %789 = vst.msk [vmem:[#allocation3 + $0x70] sm:$0xff] %vm388, %v773
    %790 = vst.msk [vmem:[#allocation3 + $0x78] sm:$0xff] %vm388, %v774
    %vm791 = vmand %vm634, %vm695
    %vm792 = vmand %vm635, %vm696
    %vm793 = vmand %vm636, %vm697
    %vm794 = vmand %vm637, %vm698
    %vm795 = vmand %vm638, %vm699
    %vm796 = vmand %vm639, %vm700
    %vm797 = vmand %vm640, %vm701
    %vm798 = vmand %vm641, %vm702
    %vm799 = vmand %vm642, %vm703
    %vm800 = vmand %vm643, %vm704
    %vm801 = vmand %vm644, %vm705
    %vm802 = vmand %vm645, %vm706
    %vm803 = vmand %vm646, %vm707
    %vm804 = vmand %vm647, %vm708
    %vm805 = vmand %vm648, %vm709
    %vm806 = vmand %vm649, %vm710
    %v807 = vld [vmem:[#allocation4] sm:$0xff]
    %v808 = vld [vmem:[#allocation4 + $0x8] sm:$0xff]
    %v809 = vld [vmem:[#allocation4 + $0x10] sm:$0xff]
    %v810 = vld [vmem:[#allocation4 + $0x18] sm:$0xff]
    %v811 = vld [vmem:[#allocation4 + $0x20] sm:$0xff]
    %v812 = vld [vmem:[#allocation4 + $0x28] sm:$0xff]
    %v813 = vld [vmem:[#allocation4 + $0x30] sm:$0xff]
    %v814 = vld [vmem:[#allocation4 + $0x38] sm:$0xff]
    %v815 = vld [vmem:[#allocation4 + $0x40] sm:$0xff]
    %v816 = vld [vmem:[#allocation4 + $0x48] sm:$0xff]
    %v817 = vld [vmem:[#allocation4 + $0x50] sm:$0xff]
    %v818 = vld [vmem:[#allocation4 + $0x58] sm:$0xff]
    %v819 = vld [vmem:[#allocation4 + $0x60] sm:$0xff]
    %v820 = vld [vmem:[#allocation4 + $0x68] sm:$0xff]
    %v821 = vld [vmem:[#allocation4 + $0x70] sm:$0xff]
    %v822 = vld [vmem:[#allocation4 + $0x78] sm:$0xff]
    %v823 = vsel %vm791, %v175, 0.0
    %v824 = vsel %vm792, %v180, 0.0
    %v825 = vsel %vm793, %v185, 0.0
    %v826 = vsel %vm794, %v190, 0.0
    %v827 = vsel %vm795, %v195, 0.0
    %v828 = vsel %vm796, %v200, 0.0
    %v829 = vsel %vm797, %v205, 0.0
    %v830 = vsel %vm798, %v210, 0.0
    %v831 = vsel %vm799, %v215, 0.0
    %v832 = vsel %vm800, %v220, 0.0
    %v833 = vsel %vm801, %v225, 0.0
    %v834 = vsel %vm802, %v230, 0.0
    %v835 = vsel %vm803, %v235, 0.0
    %v836 = vsel %vm804, %v240, 0.0
    %v837 = vsel %vm805, %v245, 0.0
    %v838 = vsel %vm806, %v250, 0.0
    %839 = vadd.xlane.f32.xlu0 %v823
    %v840 = vpop.xlane.xlu0 %839
    %841 = vadd.xlane.f32.xlu0 %v824
    %v842 = vpop.xlane.xlu0 %841
    %843 = vadd.xlane.f32.xlu0 %v825
    %v844 = vpop.xlane.xlu0 %843
    %845 = vadd.xlane.f32.xlu0 %v826
    %v846 = vpop.xlane.xlu0 %845
    %847 = vadd.xlane.f32.xlu0 %v827
    %v848 = vpop.xlane.xlu0 %847
    %849 = vadd.xlane.f32.xlu0 %v828
    %v850 = vpop.xlane.xlu0 %849
    %851 = vadd.xlane.f32.xlu0 %v829
    %v852 = vpop.xlane.xlu0 %851
    %853 = vadd.xlane.f32.xlu0 %v830
    %v854 = vpop.xlane.xlu0 %853
    %855 = vadd.xlane.f32.xlu0 %v831
    %v856 = vpop.xlane.xlu0 %855
    %857 = vadd.xlane.f32.xlu0 %v832
    %v858 = vpop.xlane.xlu0 %857
    %859 = vadd.xlane.f32.xlu0 %v833
    %v860 = vpop.xlane.xlu0 %859
    %861 = vadd.xlane.f32.xlu0 %v834
    %v862 = vpop.xlane.xlu0 %861
    %863 = vadd.xlane.f32.xlu0 %v835
    %v864 = vpop.xlane.xlu0 %863
    %865 = vadd.xlane.f32.xlu0 %v836
    %v866 = vpop.xlane.xlu0 %865
    %867 = vadd.xlane.f32.xlu0 %v837
    %v868 = vpop.xlane.xlu0 %867
    %869 = vadd.xlane.f32.xlu0 %v838
    %v870 = vpop.xlane.xlu0 %869
    %v871 = vadd.f32 %v807, %v840
    %v872 = vadd.f32 %v808, %v842
    %v873 = vadd.f32 %v809, %v844
    %v874 = vadd.f32 %v810, %v846
    %v875 = vadd.f32 %v811, %v848
    %v876 = vadd.f32 %v812, %v850
    %v877 = vadd.f32 %v813, %v852
    %v878 = vadd.f32 %v814, %v854
    %v879 = vadd.f32 %v815, %v856
    %v880 = vadd.f32 %v816, %v858
    %v881 = vadd.f32 %v817, %v860
    %v882 = vadd.f32 %v818, %v862
    %v883 = vadd.f32 %v819, %v864
    %v884 = vadd.f32 %v820, %v866
    %v885 = vadd.f32 %v821, %v868
    %v886 = vadd.f32 %v822, %v870
    %887 = vst.msk [vmem:[#allocation4] sm:$0xff] %vm388, %v871
    %888 = vst.msk [vmem:[#allocation4 + $0x8] sm:$0xff] %vm388, %v872
    %889 = vst.msk [vmem:[#allocation4 + $0x10] sm:$0xff] %vm388, %v873
    %890 = vst.msk [vmem:[#allocation4 + $0x18] sm:$0xff] %vm388, %v874
    %891 = vst.msk [vmem:[#allocation4 + $0x20] sm:$0xff] %vm388, %v875
    %892 = vst.msk [vmem:[#allocation4 + $0x28] sm:$0xff] %vm388, %v876
    %893 = vst.msk [vmem:[#allocation4 + $0x30] sm:$0xff] %vm388, %v877
    %894 = vst.msk [vmem:[#allocation4 + $0x38] sm:$0xff] %vm388, %v878
    %895 = vst.msk [vmem:[#allocation4 + $0x40] sm:$0xff] %vm388, %v879
    %896 = vst.msk [vmem:[#allocation4 + $0x48] sm:$0xff] %vm388, %v880
    %897 = vst.msk [vmem:[#allocation4 + $0x50] sm:$0xff] %vm388, %v881
    %898 = vst.msk [vmem:[#allocation4 + $0x58] sm:$0xff] %vm388, %v882
    %899 = vst.msk [vmem:[#allocation4 + $0x60] sm:$0xff] %vm388, %v883
    %900 = vst.msk [vmem:[#allocation4 + $0x68] sm:$0xff] %vm388, %v884
    %901 = vst.msk [vmem:[#allocation4 + $0x70] sm:$0xff] %vm388, %v885
    %902 = vst.msk [vmem:[#allocation4 + $0x78] sm:$0xff] %vm388, %v886
  $region33: #{tpu_custom_call.1} parent=0 // pred_fallthru
    _
  %p903 = pneg %p656
  // Predicated region
  $region34: #{tpu_custom_call.1} parent=0 // pred_check
    _
  $region35: #{tpu_custom_call.1} parent=0 // pred_check_branch
    %905 = sbr.rel (%p656) target = $region37
  $region36: #{tpu_custom_call.1} parent=0 // pred_region
    %906 = vadd.xlane.f32.xlu0 %v534
    %v907 = vpop.xlane.xlu0 %906
    %908 = vadd.xlane.f32.xlu0 %v536
    %v909 = vpop.xlane.xlu0 %908
    %910 = vadd.xlane.f32.xlu0 %v538
    %v911 = vpop.xlane.xlu0 %910
    %912 = vadd.xlane.f32.xlu0 %v540
    %v913 = vpop.xlane.xlu0 %912
    %914 = vadd.xlane.f32.xlu0 %v542
    %v915 = vpop.xlane.xlu0 %914
    %916 = vadd.xlane.f32.xlu0 %v544
    %v917 = vpop.xlane.xlu0 %916
    %918 = vadd.xlane.f32.xlu0 %v546
    %v919 = vpop.xlane.xlu0 %918
    %920 = vadd.xlane.f32.xlu0 %v548
    %v921 = vpop.xlane.xlu0 %920
    %922 = vadd.xlane.f32.xlu0 %v550
    %v923 = vpop.xlane.xlu0 %922
    %924 = vadd.xlane.f32.xlu0 %v552
    %v925 = vpop.xlane.xlu0 %924
    %926 = vadd.xlane.f32.xlu0 %v554
    %v927 = vpop.xlane.xlu0 %926
    %928 = vadd.xlane.f32.xlu0 %v556
    %v929 = vpop.xlane.xlu0 %928
    %930 = vadd.xlane.f32.xlu0 %v558
    %v931 = vpop.xlane.xlu0 %930
    %932 = vadd.xlane.f32.xlu0 %v560
    %v933 = vpop.xlane.xlu0 %932
    %934 = vadd.xlane.f32.xlu0 %v562
    %v935 = vpop.xlane.xlu0 %934
    %936 = vadd.xlane.f32.xlu0 %v564
    %v937 = vpop.xlane.xlu0 %936
    %v938 = vadd.f32 %v421, %v907
    %v939 = vadd.f32 %v422, %v909
    %v940 = vadd.f32 %v423, %v911
    %v941 = vadd.f32 %v424, %v913
    %v942 = vadd.f32 %v425, %v915
    %v943 = vadd.f32 %v426, %v917
    %v944 = vadd.f32 %v427, %v919
    %v945 = vadd.f32 %v428, %v921
    %v946 = vadd.f32 %v429, %v923
    %v947 = vadd.f32 %v430, %v925
    %v948 = vadd.f32 %v431, %v927
    %v949 = vadd.f32 %v432, %v929
    %v950 = vadd.f32 %v433, %v931
    %v951 = vadd.f32 %v434, %v933
    %v952 = vadd.f32 %v435, %v935
    %v953 = vadd.f32 %v436, %v937
    %954 = vst.msk [vmem:[#allocation3] sm:$0xff] %vm388, %v938
    %955 = vst.msk [vmem:[#allocation3 + $0x8] sm:$0xff] %vm388, %v939
    %956 = vst.msk [vmem:[#allocation3 + $0x10] sm:$0xff] %vm388, %v940
    %957 = vst.msk [vmem:[#allocation3 + $0x18] sm:$0xff] %vm388, %v941
    %958 = vst.msk [vmem:[#allocation3 + $0x20] sm:$0xff] %vm388, %v942
    %959 = vst.msk [vmem:[#allocation3 + $0x28] sm:$0xff] %vm388, %v943
    %960 = vst.msk [vmem:[#allocation3 + $0x30] sm:$0xff] %vm388, %v944
    %961 = vst.msk [vmem:[#allocation3 + $0x38] sm:$0xff] %vm388, %v945
    %962 = vst.msk [vmem:[#allocation3 + $0x40] sm:$0xff] %vm388, %v946
    %963 = vst.msk [vmem:[#allocation3 + $0x48] sm:$0xff] %vm388, %v947
    %964 = vst.msk [vmem:[#allocation3 + $0x50] sm:$0xff] %vm388, %v948
    %965 = vst.msk [vmem:[#allocation3 + $0x58] sm:$0xff] %vm388, %v949
    %966 = vst.msk [vmem:[#allocation3 + $0x60] sm:$0xff] %vm388, %v950
    %967 = vst.msk [vmem:[#allocation3 + $0x68] sm:$0xff] %vm388, %v951
    %968 = vst.msk [vmem:[#allocation3 + $0x70] sm:$0xff] %vm388, %v952
    %969 = vst.msk [vmem:[#allocation3 + $0x78] sm:$0xff] %vm388, %v953
    %v970 = vld [vmem:[#allocation4] sm:$0xff]
    %v971 = vld [vmem:[#allocation4 + $0x8] sm:$0xff]
    %v972 = vld [vmem:[#allocation4 + $0x10] sm:$0xff]
    %v973 = vld [vmem:[#allocation4 + $0x18] sm:$0xff]
    %v974 = vld [vmem:[#allocation4 + $0x20] sm:$0xff]
    %v975 = vld [vmem:[#allocation4 + $0x28] sm:$0xff]
    %v976 = vld [vmem:[#allocation4 + $0x30] sm:$0xff]
    %v977 = vld [vmem:[#allocation4 + $0x38] sm:$0xff]
    %v978 = vld [vmem:[#allocation4 + $0x40] sm:$0xff]
    %v979 = vld [vmem:[#allocation4 + $0x48] sm:$0xff]
    %v980 = vld [vmem:[#allocation4 + $0x50] sm:$0xff]
    %v981 = vld [vmem:[#allocation4 + $0x58] sm:$0xff]
    %v982 = vld [vmem:[#allocation4 + $0x60] sm:$0xff]
    %v983 = vld [vmem:[#allocation4 + $0x68] sm:$0xff]
    %v984 = vld [vmem:[#allocation4 + $0x70] sm:$0xff]
    %v985 = vld [vmem:[#allocation4 + $0x78] sm:$0xff]
    %v986 = vsel %vm634, %v175, 0.0
    %v987 = vsel %vm635, %v180, 0.0
    %v988 = vsel %vm636, %v185, 0.0
    %v989 = vsel %vm637, %v190, 0.0
    %v990 = vsel %vm638, %v195, 0.0
    %v991 = vsel %vm639, %v200, 0.0
    %v992 = vsel %vm640, %v205, 0.0
    %v993 = vsel %vm641, %v210, 0.0
    %v994 = vsel %vm642, %v215, 0.0
    %v995 = vsel %vm643, %v220, 0.0
    %v996 = vsel %vm644, %v225, 0.0
    %v997 = vsel %vm645, %v230, 0.0
    %v998 = vsel %vm646, %v235, 0.0
    %v999 = vsel %vm647, %v240, 0.0
    %v1000 = vsel %vm648, %v245, 0.0
    %v1001 = vsel %vm649, %v250, 0.0
    %1002 = vadd.xlane.f32.xlu0 %v986
    %v1003 = vpop.xlane.xlu0 %1002
    %1004 = vadd.xlane.f32.xlu0 %v987
    %v1005 = vpop.xlane.xlu0 %1004
    %1006 = vadd.xlane.f32.xlu0 %v988
    %v1007 = vpop.xlane.xlu0 %1006
    %1008 = vadd.xlane.f32.xlu0 %v989
    %v1009 = vpop.xlane.xlu0 %1008
    %1010 = vadd.xlane.f32.xlu0 %v990
    %v1011 = vpop.xlane.xlu0 %1010
    %1012 = vadd.xlane.f32.xlu0 %v991
    %v1013 = vpop.xlane.xlu0 %1012
    %1014 = vadd.xlane.f32.xlu0 %v992
    %v1015 = vpop.xlane.xlu0 %1014
    %1016 = vadd.xlane.f32.xlu0 %v993
    %v1017 = vpop.xlane.xlu0 %1016
    %1018 = vadd.xlane.f32.xlu0 %v994
    %v1019 = vpop.xlane.xlu0 %1018
    %1020 = vadd.xlane.f32.xlu0 %v995
    %v1021 = vpop.xlane.xlu0 %1020
    %1022 = vadd.xlane.f32.xlu0 %v996
    %v1023 = vpop.xlane.xlu0 %1022
    %1024 = vadd.xlane.f32.xlu0 %v997
    %v1025 = vpop.xlane.xlu0 %1024
    %1026 = vadd.xlane.f32.xlu0 %v998
    %v1027 = vpop.xlane.xlu0 %1026
    %1028 = vadd.xlane.f32.xlu0 %v999
    %v1029 = vpop.xlane.xlu0 %1028
    %1030 = vadd.xlane.f32.xlu0 %v1000
    %v1031 = vpop.xlane.xlu0 %1030
    %1032 = vadd.xlane.f32.xlu0 %v1001
    %v1033 = vpop.xlane.xlu0 %1032
    %v1034 = vadd.f32 %v970, %v1003
    %v1035 = vadd.f32 %v971, %v1005
    %v1036 = vadd.f32 %v972, %v1007
    %v1037 = vadd.f32 %v973, %v1009
    %v1038 = vadd.f32 %v974, %v1011
    %v1039 = vadd.f32 %v975, %v1013
    %v1040 = vadd.f32 %v976, %v1015
    %v1041 = vadd.f32 %v977, %v1017
    %v1042 = vadd.f32 %v978, %v1019
    %v1043 = vadd.f32 %v979, %v1021
    %v1044 = vadd.f32 %v980, %v1023
    %v1045 = vadd.f32 %v981, %v1025
    %v1046 = vadd.f32 %v982, %v1027
    %v1047 = vadd.f32 %v983, %v1029
    %v1048 = vadd.f32 %v984, %v1031
    %v1049 = vadd.f32 %v985, %v1033
    %1050 = vst.msk [vmem:[#allocation4] sm:$0xff] %vm388, %v1034
    %1051 = vst.msk [vmem:[#allocation4 + $0x8] sm:$0xff] %vm388, %v1035
    %1052 = vst.msk [vmem:[#allocation4 + $0x10] sm:$0xff] %vm388, %v1036
    %1053 = vst.msk [vmem:[#allocation4 + $0x18] sm:$0xff] %vm388, %v1037
    %1054 = vst.msk [vmem:[#allocation4 + $0x20] sm:$0xff] %vm388, %v1038
    %1055 = vst.msk [vmem:[#allocation4 + $0x28] sm:$0xff] %vm388, %v1039
    %1056 = vst.msk [vmem:[#allocation4 + $0x30] sm:$0xff] %vm388, %v1040
    %1057 = vst.msk [vmem:[#allocation4 + $0x38] sm:$0xff] %vm388, %v1041
    %1058 = vst.msk [vmem:[#allocation4 + $0x40] sm:$0xff] %vm388, %v1042
    %1059 = vst.msk [vmem:[#allocation4 + $0x48] sm:$0xff] %vm388, %v1043
    %1060 = vst.msk [vmem:[#allocation4 + $0x50] sm:$0xff] %vm388, %v1044
    %1061 = vst.msk [vmem:[#allocation4 + $0x58] sm:$0xff] %vm388, %v1045
    %1062 = vst.msk [vmem:[#allocation4 + $0x60] sm:$0xff] %vm388, %v1046
    %1063 = vst.msk [vmem:[#allocation4 + $0x68] sm:$0xff] %vm388, %v1047
    %1064 = vst.msk [vmem:[#allocation4 + $0x70] sm:$0xff] %vm388, %v1048
    %1065 = vst.msk [vmem:[#allocation4 + $0x78] sm:$0xff] %vm388, %v1049
  $region37: #{tpu_custom_call.1} parent=0 // pred_fallthru
    _
  // Predicated region
  $region38: #{tpu_custom_call.1} parent=0 // pred_check
    %p1066 = pneg %p23
  $region39: #{tpu_custom_call.1} parent=0 // pred_check_branch
    %1068 = sbr.rel (%p1066) target = $region41
  $region40: #{tpu_custom_call.1} parent=0 // pred_region
    %v1069 = vld [vmem:[%s2] sm:$0xff]
    %v1070 = vld [vmem:[%s2 + $0x8] sm:$0xff]
    %v1071 = vld [vmem:[%s2 + $0x10] sm:$0xff]
    %v1072 = vld [vmem:[%s2 + $0x18] sm:$0xff]
    %v1073 = vld [vmem:[%s2 + $0x20] sm:$0xff]
    %v1074 = vld [vmem:[%s2 + $0x28] sm:$0xff]
    %v1075 = vld [vmem:[%s2 + $0x30] sm:$0xff]
    %v1076 = vld [vmem:[%s2 + $0x38] sm:$0xff]
    %v1077 = vld [vmem:[%s2 + $0x40] sm:$0xff]
    %v1078 = vld [vmem:[%s2 + $0x48] sm:$0xff]
    %v1079 = vld [vmem:[%s2 + $0x50] sm:$0xff]
    %v1080 = vld [vmem:[%s2 + $0x58] sm:$0xff]
    %v1081 = vld [vmem:[%s2 + $0x60] sm:$0xff]
    %v1082 = vld [vmem:[%s2 + $0x68] sm:$0xff]
    %v1083 = vld [vmem:[%s2 + $0x70] sm:$0xff]
    %v1084 = vld [vmem:[%s2 + $0x78] sm:$0xff]
    %v1085 = vld [vmem:[#allocation2] sm:$0xff]
    %v1086 = vld [vmem:[#allocation2 + $0x8] sm:$0xff]
    %v1087 = vld [vmem:[#allocation2 + $0x10] sm:$0xff]
    %v1088 = vld [vmem:[#allocation2 + $0x18] sm:$0xff]
    %v1089 = vld [vmem:[#allocation2 + $0x20] sm:$0xff]
    %v1090 = vld [vmem:[#allocation2 + $0x28] sm:$0xff]
    %v1091 = vld [vmem:[#allocation2 + $0x30] sm:$0xff]
    %v1092 = vld [vmem:[#allocation2 + $0x38] sm:$0xff]
    %v1093 = vld [vmem:[#allocation2 + $0x40] sm:$0xff]
    %v1094 = vld [vmem:[#allocation2 + $0x48] sm:$0xff]
    %v1095 = vld [vmem:[#allocation2 + $0x50] sm:$0xff]
    %v1096 = vld [vmem:[#allocation2 + $0x58] sm:$0xff]
    %v1097 = vld [vmem:[#allocation2 + $0x60] sm:$0xff]
    %v1098 = vld [vmem:[#allocation2 + $0x68] sm:$0xff]
    %v1099 = vld [vmem:[#allocation2 + $0x70] sm:$0xff]
    %v1100 = vld [vmem:[#allocation2 + $0x78] sm:$0xff]
    %v1101 = vld [vmem:[#allocation3] sm:$0xff]
    %v1102 = vld [vmem:[#allocation3 + $0x8] sm:$0xff]
    %v1103 = vld [vmem:[#allocation3 + $0x10] sm:$0xff]
    %v1104 = vld [vmem:[#allocation3 + $0x18] sm:$0xff]
    %v1105 = vld [vmem:[#allocation3 + $0x20] sm:$0xff]
    %v1106 = vld [vmem:[#allocation3 + $0x28] sm:$0xff]
    %v1107 = vld [vmem:[#allocation3 + $0x30] sm:$0xff]
    %v1108 = vld [vmem:[#allocation3 + $0x38] sm:$0xff]
    %v1109 = vld [vmem:[#allocation3 + $0x40] sm:$0xff]
    %v1110 = vld [vmem:[#allocation3 + $0x48] sm:$0xff]
    %v1111 = vld [vmem:[#allocation3 + $0x50] sm:$0xff]
    %v1112 = vld [vmem:[#allocation3 + $0x58] sm:$0xff]
    %v1113 = vld [vmem:[#allocation3 + $0x60] sm:$0xff]
    %v1114 = vld [vmem:[#allocation3 + $0x68] sm:$0xff]
    %v1115 = vld [vmem:[#allocation3 + $0x70] sm:$0xff]
    %v1116 = vld [vmem:[#allocation3 + $0x78] sm:$0xff]
    %v1117 = vadd.f32 %v1101, 1e-10
    %v1118 = vadd.f32 %v1102, 1e-10
    %v1119 = vadd.f32 %v1103, 1e-10
    %v1120 = vadd.f32 %v1104, 1e-10
    %v1121 = vadd.f32 %v1105, 1e-10
    %v1122 = vadd.f32 %v1106, 1e-10
    %v1123 = vadd.f32 %v1107, 1e-10
    %v1124 = vadd.f32 %v1108, 1e-10
    %v1125 = vadd.f32 %v1109, 1e-10
    %v1126 = vadd.f32 %v1110, 1e-10
    %v1127 = vadd.f32 %v1111, 1e-10
    %v1128 = vadd.f32 %v1112, 1e-10
    %v1129 = vadd.f32 %v1113, 1e-10
    %v1130 = vadd.f32 %v1114, 1e-10
    %v1131 = vadd.f32 %v1115, 1e-10
    %v1132 = vadd.f32 %v1116, 1e-10
    %v1133 = vlog2.pop %v1117
    %v1134 = vmul.f32 %v1133, 0.6931472
    %v1135 = vlog2.pop %v1118
    %v1136 = vmul.f32 %v1135, 0.6931472
    %v1137 = vlog2.pop %v1119
    %v1138 = vmul.f32 %v1137, 0.6931472
    %v1139 = vlog2.pop %v1120
    %v1140 = vmul.f32 %v1139, 0.6931472
    %v1141 = vlog2.pop %v1121
    %v1142 = vmul.f32 %v1141, 0.6931472
    %v1143 = vlog2.pop %v1122
    %v1144 = vmul.f32 %v1143, 0.6931472
    %v1145 = vlog2.pop %v1123
    %v1146 = vmul.f32 %v1145, 0.6931472
    %v1147 = vlog2.pop %v1124
    %v1148 = vmul.f32 %v1147, 0.6931472
    %v1149 = vlog2.pop %v1125
    %v1150 = vmul.f32 %v1149, 0.6931472
    %v1151 = vlog2.pop %v1126
    %v1152 = vmul.f32 %v1151, 0.6931472
    %v1153 = vlog2.pop %v1127
    %v1154 = vmul.f32 %v1153, 0.6931472
    %v1155 = vlog2.pop %v1128
    %v1156 = vmul.f32 %v1155, 0.6931472
    %v1157 = vlog2.pop %v1129
    %v1158 = vmul.f32 %v1157, 0.6931472
    %v1159 = vlog2.pop %v1130
    %v1160 = vmul.f32 %v1159, 0.6931472
    %v1161 = vlog2.pop %v1131
    %v1162 = vmul.f32 %v1161, 0.6931472
    %v1163 = vlog2.pop %v1132
    %v1164 = vmul.f32 %v1163, 0.6931472
    %v1165 = vadd.f32 %v1085, %v1134
    %v1166 = vadd.f32 %v1086, %v1136
    %v1167 = vadd.f32 %v1087, %v1138
    %v1168 = vadd.f32 %v1088, %v1140
    %v1169 = vadd.f32 %v1089, %v1142
    %v1170 = vadd.f32 %v1090, %v1144
    %v1171 = vadd.f32 %v1091, %v1146
    %v1172 = vadd.f32 %v1092, %v1148
    %v1173 = vadd.f32 %v1093, %v1150
    %v1174 = vadd.f32 %v1094, %v1152
    %v1175 = vadd.f32 %v1095, %v1154
    %v1176 = vadd.f32 %v1096, %v1156
    %v1177 = vadd.f32 %v1097, %v1158
    %v1178 = vadd.f32 %v1098, %v1160
    %v1179 = vadd.f32 %v1099, %v1162
    %v1180 = vadd.f32 %v1100, %v1164
    %v1181 = vld [vmem:[#allocation4] sm:$0xff]
    %v1182 = vld [vmem:[#allocation4 + $0x8] sm:$0xff]
    %v1183 = vld [vmem:[#allocation4 + $0x10] sm:$0xff]
    %v1184 = vld [vmem:[#allocation4 + $0x18] sm:$0xff]
    %v1185 = vld [vmem:[#allocation4 + $0x20] sm:$0xff]
    %v1186 = vld [vmem:[#allocation4 + $0x28] sm:$0xff]
    %v1187 = vld [vmem:[#allocation4 + $0x30] sm:$0xff]
    %v1188 = vld [vmem:[#allocation4 + $0x38] sm:$0xff]
    %v1189 = vld [vmem:[#allocation4 + $0x40] sm:$0xff]
    %v1190 = vld [vmem:[#allocation4 + $0x48] sm:$0xff]
    %v1191 = vld [vmem:[#allocation4 + $0x50] sm:$0xff]
    %v1192 = vld [vmem:[#allocation4 + $0x58] sm:$0xff]
    %v1193 = vld [vmem:[#allocation4 + $0x60] sm:$0xff]
    %v1194 = vld [vmem:[#allocation4 + $0x68] sm:$0xff]
    %v1195 = vld [vmem:[#allocation4 + $0x70] sm:$0xff]
    %v1196 = vld [vmem:[#allocation4 + $0x78] sm:$0xff]
    %v1197 = vmul.f32 %v1069, %v1165
    %v1198 = vmul.f32 %v1070, %v1166
    %v1199 = vmul.f32 %v1071, %v1167
    %v1200 = vmul.f32 %v1072, %v1168
    %v1201 = vmul.f32 %v1073, %v1169
    %v1202 = vmul.f32 %v1074, %v1170
    %v1203 = vmul.f32 %v1075, %v1171
    %v1204 = vmul.f32 %v1076, %v1172
    %v1205 = vmul.f32 %v1077, %v1173
    %v1206 = vmul.f32 %v1078, %v1174
    %v1207 = vmul.f32 %v1079, %v1175
    %v1208 = vmul.f32 %v1080, %v1176
    %v1209 = vmul.f32 %v1081, %v1177
    %v1210 = vmul.f32 %v1082, %v1178
    %v1211 = vmul.f32 %v1083, %v1179
    %v1212 = vmul.f32 %v1084, %v1180
    %v1213 = vsub.f32 %v1181, %v1197
    %v1214 = vsub.f32 %v1182, %v1198
    %v1215 = vsub.f32 %v1183, %v1199
    %v1216 = vsub.f32 %v1184, %v1200
    %v1217 = vsub.f32 %v1185, %v1201
    %v1218 = vsub.f32 %v1186, %v1202
    %v1219 = vsub.f32 %v1187, %v1203
    %v1220 = vsub.f32 %v1188, %v1204
    %v1221 = vsub.f32 %v1189, %v1205
    %v1222 = vsub.f32 %v1190, %v1206
    %v1223 = vsub.f32 %v1191, %v1207
    %v1224 = vsub.f32 %v1192, %v1208
    %v1225 = vsub.f32 %v1193, %v1209
    %v1226 = vsub.f32 %v1194, %v1210
    %v1227 = vsub.f32 %v1195, %v1211
    %v1228 = vsub.f32 %v1196, %v1212
    %v1229 = vadd.f32 %v1069, 1e-10
    %v1230 = vadd.f32 %v1070, 1e-10
    %v1231 = vadd.f32 %v1071, 1e-10
    %v1232 = vadd.f32 %v1072, 1e-10
    %v1233 = vadd.f32 %v1073, 1e-10
    %v1234 = vadd.f32 %v1074, 1e-10
    %v1235 = vadd.f32 %v1075, 1e-10
    %v1236 = vadd.f32 %v1076, 1e-10
    %v1237 = vadd.f32 %v1077, 1e-10
    %v1238 = vadd.f32 %v1078, 1e-10
    %v1239 = vadd.f32 %v1079, 1e-10
    %v1240 = vadd.f32 %v1080, 1e-10
    %v1241 = vadd.f32 %v1081, 1e-10
    %v1242 = vadd.f32 %v1082, 1e-10
    %v1243 = vadd.f32 %v1083, 1e-10
    %v1244 = vadd.f32 %v1084, 1e-10
    %v1245 = vrcp.pop %v1229
    %v1246 = vmul.f32 %v1213, %v1245
    %v1247 = vrcp.pop %v1230
    %v1248 = vmul.f32 %v1214, %v1247
    %v1249 = vrcp.pop %v1231
    %v1250 = vmul.f32 %v1215, %v1249
    %v1251 = vrcp.pop %v1232
    %v1252 = vmul.f32 %v1216, %v1251
    %v1253 = vrcp.pop %v1233
    %v1254 = vmul.f32 %v1217, %v1253
    %v1255 = vrcp.pop %v1234
    %v1256 = vmul.f32 %v1218, %v1255
    %v1257 = vrcp.pop %v1235
    %v1258 = vmul.f32 %v1219, %v1257
    %v1259 = vrcp.pop %v1236
    %v1260 = vmul.f32 %v1220, %v1259
    %v1261 = vrcp.pop %v1237
    %v1262 = vmul.f32 %v1221, %v1261
    %v1263 = vrcp.pop %v1238
    %v1264 = vmul.f32 %v1222, %v1263
    %v1265 = vrcp.pop %v1239
    %v1266 = vmul.f32 %v1223, %v1265
    %v1267 = vrcp.pop %v1240
    %v1268 = vmul.f32 %v1224, %v1267
    %v1269 = vrcp.pop %v1241
    %v1270 = vmul.f32 %v1225, %v1269
    %v1271 = vrcp.pop %v1242
    %v1272 = vmul.f32 %v1226, %v1271
    %v1273 = vrcp.pop %v1243
    %v1274 = vmul.f32 %v1227, %v1273
    %v1275 = vrcp.pop %v1244
    %v1276 = vmul.f32 %v1228, %v1275
    %1277 = vst.msk [vmem:[%s6] sm:$0xff] %vm388, %v1246
    %1278 = vst.msk [vmem:[%s6 + $0x8] sm:$0xff] %vm388, %v1248
    %1279 = vst.msk [vmem:[%s6 + $0x10] sm:$0xff] %vm388, %v1250
    %1280 = vst.msk [vmem:[%s6 + $0x18] sm:$0xff] %vm388, %v1252
    %1281 = vst.msk [vmem:[%s6 + $0x20] sm:$0xff] %vm388, %v1254
    %1282 = vst.msk [vmem:[%s6 + $0x28] sm:$0xff] %vm388, %v1256
    %1283 = vst.msk [vmem:[%s6 + $0x30] sm:$0xff] %vm388, %v1258
    %1284 = vst.msk [vmem:[%s6 + $0x38] sm:$0xff] %vm388, %v1260
    %1285 = vst.msk [vmem:[%s6 + $0x40] sm:$0xff] %vm388, %v1262
    %1286 = vst.msk [vmem:[%s6 + $0x48] sm:$0xff] %vm388, %v1264
    %1287 = vst.msk [vmem:[%s6 + $0x50] sm:$0xff] %vm388, %v1266
    %1288 = vst.msk [vmem:[%s6 + $0x58] sm:$0xff] %vm388, %v1268
    %1289 = vst.msk [vmem:[%s6 + $0x60] sm:$0xff] %vm388, %v1270
    %1290 = vst.msk [vmem:[%s6 + $0x68] sm:$0xff] %vm388, %v1272
    %1291 = vst.msk [vmem:[%s6 + $0x70] sm:$0xff] %vm388, %v1274
    %1292 = vst.msk [vmem:[%s6 + $0x78] sm:$0xff] %vm388, %v1276
  $region41: #{tpu_custom_call.1} parent=0 // pred_fallthru
    _
  // Predicated region
  $region42: #{tpu_custom_call.1} parent=0 // pred_check
    _
  $region43: #{tpu_custom_call.1} parent=0 // pred_check_branch
    %1294 = sbr.rel (0) target = $region45
  $region44: #{tpu_custom_call.1} parent=0 // pred_region
    _
  $region45: #{tpu_custom_call.1} parent=0 // pred_fallthru
    _
  // Predicated region
  $region46: #{tpu_custom_call.1} parent=0 // pred_check
    _
  $region47: #{tpu_custom_call.1} parent=0 // pred_check_branch
    %1296 = sbr.rel (0) target = $region49
  $region48: #{tpu_custom_call.1} parent=0 // pred_region
    _
  $region49: #{tpu_custom_call.1} parent=0 // pred_fallthru
    _

</llo_original>
